<compile_context>
chip_gen: v6e
topology: v6e:2x2x1
jax: 0.10.0
libtpu: 0.0.40
codegen_flags: <defaults>
</compile_context>

<pallas_src>
import functools

import jax
import jax.numpy as jnp
from jax.experimental import pallas as pl
from jax.experimental.pallas import tpu as pltpu

# Hahn polynomial parameters used by the module: HahnPolynomials(d, d, 3, 1, 1, 7)
DEGREE = 3
ALPHA = 1.0
BETA = 1.0
NPARAM = 7.0

_Q1_COEF = (ALPHA + BETA + 2.0) / ((ALPHA + 1.0) * NPARAM)


def _hahn_recurrence_consts():
    """Trace-time (A_n, C_n, 1/A_n) for n = 1..DEGREE-1 (no in-kernel division)."""
    consts = []
    for n in range(1, DEGREE):
        nf = float(n)
        an = ((nf + ALPHA + BETA + 1.0) * (nf + ALPHA + 1.0) * (NPARAM - nf)
              / ((2.0 * nf + ALPHA + BETA + 1.0) * (2.0 * nf + ALPHA + BETA + 2.0)))
        cn = (nf * (nf + ALPHA + BETA + NPARAM + 1.0) * (nf + BETA)
              / ((2.0 * nf + ALPHA + BETA) * (2.0 * nf + ALPHA + BETA + 1.0)))
        consts.append((an, cn, 1.0 / an))
    return consts


_REC_CONSTS = _hahn_recurrence_consts()


def _hahn_qs(t):
    """Hahn basis [Q_0 .. Q_DEGREE] evaluated at t (already tanh-normalized), f32."""
    q0 = jnp.ones_like(t)
    q1 = 1.0 - _Q1_COEF * t
    qs = [q0, q1]
    for an, cn, inv_an in _REC_CONSTS:
        q_next = ((an + cn - t) * qs[-1] - cn * qs[-2]) * inv_an
        qs.append(q_next)
    return qs


# -----------------------------------------------------------------------------
# Fused backbone kernel: W_P + pos-embed + 5x (intra KAN, inter KAN, residual)
# -----------------------------------------------------------------------------
def _backbone_kernel(x_ref, wp_ref, bp_ref, pos_ref, intra_ref, inter_ref, o_ref):
    S, P, L = x_ref.shape            # (seq_tile, patch_num, patch_len)
    D = pos_ref.shape[-1]            # d_model
    n_layers = intra_ref.shape[0]

    # --- W_P linear + bias + positional embedding (one big-M 2-D matmul) ---
    x2 = x_ref[...].astype(jnp.float32).reshape(S * P, L)
    u2 = jnp.dot(x2, wp_ref[...], preferred_element_type=jnp.float32) + bp_ref[...]
    z = u2.reshape(S, P, D) + pos_ref[...]          # (S, P, D); pos broadcasts over S

    for l in range(n_layers):
        # --- intra-patch KAN: contraction over d_model, K-fused basis matmul ---
        t2 = jnp.tanh(z.reshape(S * P, D))
        basis2 = jnp.concatenate(_hahn_qs(t2), axis=-1)          # (S*P, (deg+1)*D)
        a = jnp.dot(basis2, intra_ref[l],
                    preferred_element_type=jnp.float32).reshape(S, P, D)

        # --- inter-patch KAN: contraction over the patch axis, batched dot_general
        #     (replaces the old JAX transpose + second pallas_call) ---
        t3 = jnp.tanh(a)                                         # (S, P, D)
        basis3 = jnp.concatenate(_hahn_qs(t3), axis=1)           # (S, (deg+1)*P, D)
        c_t = jnp.broadcast_to(inter_ref[l], (S,) + inter_ref.shape[1:])  # (S, P, (deg+1)*P)
        y = jax.lax.dot_general(
            c_t, basis3,
            dimension_numbers=(((2,), (1,)), ((0,), (0,))),
            preferred_element_type=jnp.float32)                  # (S, P, D)

        z = z + y                                                # residual, fused

    o_ref[...] = z.astype(o_ref.dtype)


# -----------------------------------------------------------------------------
# Wrapper
# -----------------------------------------------------------------------------
def _choose_seq_tile(n_seq, patch_num):
    """Sequences per grid step: target ~256 matmul rows (seq_tile*patch_num) per step
    for MXU fill, but keep >=2 grid steps whenever possible (v7x has 2 TCs)."""
    target = max(1, 256 // max(patch_num, 1))
    tile = max(1, min(target, n_seq))
    if n_seq >= 2 and pl.cdiv(n_seq, tile) < 2:
        tile = pl.cdiv(n_seq, 2)
    return tile


def backbone_forward(x, params, *, patch_num, patch_len, d_model):
    """x: (bs, n_vars, patch_len, patch_num) -> (bs, n_vars, d_model, patch_num)."""
    bs, n_vars = x.shape[0], x.shape[1]
    n_seq = bs * n_vars
    n_layers = len(params["encoder"])

    # (bs, n_vars, patch_len, patch_num) -> (n_seq, patch_num, patch_len)
    xp = jnp.transpose(x, (0, 1, 3, 2)).reshape(n_seq, patch_num, patch_len)

    seq_tile = _choose_seq_tile(n_seq, patch_num)
    n_pad = pl.cdiv(n_seq, seq_tile) * seq_tile
    if n_pad != n_seq:  # pad at most once (never per layer / per call)
        xp = jnp.concatenate(
            [xp, jnp.zeros((n_pad - n_seq, patch_num, patch_len), xp.dtype)], axis=0)

    wp = params["W_P_w"].astype(jnp.float32)                       # (L, D)
    bp = params["W_P_b"].astype(jnp.float32).reshape(1, d_model)   # (1, D)
    pos = params["W_pos"][0, :patch_num, :].astype(jnp.float32)    # (P, D)
    # K-fused coefficient layouts:
    #   intra: (deg+1, D, D) -> ((deg+1)*D, D), row index = k*D + d_in
    #   inter: (deg+1, P, P) -> (P, (deg+1)*P), col index = k*P + p_in
    intra_all = jnp.stack(
        [lp["intra"].astype(jnp.float32).reshape((DEGREE + 1) * d_model, d_model)
         for lp in params["encoder"]], axis=0)
    inter_all = jnp.stack(
        [jnp.transpose(lp["inter"].astype(jnp.float32), (2, 0, 1))
            .reshape(patch_num, (DEGREE + 1) * patch_num)
         for lp in params["encoder"]], axis=0)

    grid = (n_pad // seq_tile,)
    out = pl.pallas_call(
        _backbone_kernel,
        out_shape=jax.ShapeDtypeStruct((n_pad, patch_num, d_model), x.dtype),
        grid=grid,
        in_specs=[
            pl.BlockSpec((seq_tile, patch_num, patch_len), lambda i: (i, 0, 0)),
            pl.BlockSpec((patch_len, d_model), lambda i: (0, 0)),
            pl.BlockSpec((1, d_model), lambda i: (0, 0)),
            pl.BlockSpec((patch_num, d_model), lambda i: (0, 0)),
            pl.BlockSpec((n_layers, (DEGREE + 1) * d_model, d_model),
                         lambda i: (0, 0, 0)),
            pl.BlockSpec((n_layers, patch_num, (DEGREE + 1) * patch_num),
                         lambda i: (0, 0, 0)),
        ],
        out_specs=pl.BlockSpec((seq_tile, patch_num, d_model), lambda i: (i, 0, 0)),
        compiler_params=pltpu.CompilerParams(dimension_semantics=("parallel",)),
    )(xp, wp, bp, pos, intra_all, inter_all)

    z = out[:n_seq].reshape(bs, n_vars, patch_num, d_model)
    return jnp.transpose(z, (0, 1, 3, 2))


# -----------------------------------------------------------------------------
# Pure-JAX reference (same math) for a correctness check
# -----------------------------------------------------------------------------
def reference_forward(x, params, *, patch_num, patch_len, d_model):
    bs, n_vars = x.shape[0], x.shape[1]
    xp = jnp.transpose(x, (0, 1, 3, 2)).reshape(-1, patch_len).astype(jnp.float32)
    u = xp @ params["W_P_w"] + params["W_P_b"]
    u = u.reshape(bs * n_vars, patch_num, d_model) + params["W_pos"][:, :patch_num, :]
    z = u
    hp = jax.lax.Precision.HIGHEST
    for lp in params["encoder"]:
        basis = jnp.concatenate(_hahn_qs(jnp.tanh(z)), axis=-1)     # (B, P, (deg+1)*D)
        a = jnp.einsum("bpm,md->bpd", basis,
                       lp["intra"].reshape((DEGREE + 1) * d_model, d_model),
                       precision=hp)
        basis2 = jnp.stack(_hahn_qs(jnp.tanh(a)), axis=1)           # (B, deg+1, P, D)
        y = jnp.einsum("bkqd,kqp->bpd", basis2, lp["inter"], precision=hp)
        z = z + y
    z = z.reshape(bs, n_vars, patch_num, d_model)
    return jnp.transpose(z, (0, 1, 3, 2))


# -----------------------------------------------------------------------------
# Deterministic parameter init (synthetic; no checkpoint load)
# -----------------------------------------------------------------------------
def init_params(key, *, patch_num, patch_len, d_model, n_layers=5):
    ks = jax.random.split(key, 3 + 2 * n_layers)
    params = {
        "W_P_w": jax.random.normal(ks[0], (patch_len, d_model), jnp.float32)
                 * (1.0 / jnp.sqrt(patch_len)),
        "W_P_b": jax.random.normal(ks[1], (d_model,), jnp.float32) * 0.01,
        "W_pos": jax.random.normal(ks[2], (1, patch_num, d_model), jnp.float32),
        "encoder": [],
    }
    std_intra = 1.0 / (d_model * (DEGREE + 1))
    std_inter = 1.0 / (patch_num * (DEGREE + 1))
    for l in range(n_layers):
        intra = jax.random.normal(ks[3 + 2 * l],
                                  (DEGREE + 1, d_model, d_model), jnp.float32) * std_intra
        inter = jax.random.normal(ks[4 + 2 * l],
                                  (DEGREE + 1, patch_num, patch_num), jnp.float32) * std_inter
        params["encoder"].append({"intra": intra, "inter": inter})
    return params


if __name__ == "__main__":
    bs, n_vars = 2, 3
    patch_len, patch_num, d_model = 16, 8, 32

    key = jax.random.PRNGKey(0)
    k_x, k_p = jax.random.split(key)
    x = jax.random.normal(k_x, (bs, n_vars, patch_len, patch_num), jnp.float32)
    params = init_params(k_p, patch_num=patch_num, patch_len=patch_len, d_model=d_model)

    fwd = jax.jit(functools.partial(backbone_forward,
                                    patch_num=patch_num,
                                    patch_len=patch_len,
                                    d_model=d_model))
    out = fwd(x, params)
    jax.block_until_ready(out)

    assert out.shape == (bs, n_vars, d_model, patch_num), out.shape
    assert bool(jnp.all(jnp.isfinite(out)))

    ref = reference_forward(x, params, patch_num=patch_num,
                            patch_len=patch_len, d_model=d_model)
    err = float(jnp.max(jnp.abs(out.astype(jnp.float32) - ref)))
    assert err < 5e-2, f"kernel vs reference max abs err = {err}"
    print("KERNEL_OK")
</pallas_src>

<mosaic_0001>
module attributes {stable_mosaic.version = 11 : i64} {
  func.func @_backbone_kernel(%arg0: i32, %arg1: memref<3x8x16xf32, #tpu.memory_space<vmem>>, %arg2: memref<16x32xf32, #tpu.memory_space<vmem>>, %arg3: memref<1x32xf32, #tpu.memory_space<vmem>>, %arg4: memref<8x32xf32, #tpu.memory_space<vmem>>, %arg5: memref<5x128x32xf32, #tpu.memory_space<vmem>>, %arg6: memref<5x8x32xf32, #tpu.memory_space<vmem>>, %arg7: memref<3x8x32xf32, #tpu.memory_space<vmem>>) attributes {dimension_semantics = [#tpu.dimension_semantics<parallel>], iteration_bounds = array<i64: 2>, scalar_prefetch = 0 : i64, scratch_operands = 0 : i64, tpu.core_type = #tpu.core_type<tc>, window_params = [{transform_indices = @transform_0, window_bounds = array<i64: 3, 8, 16>}, {pipeline_mode = #tpu.pipeline_mode<synchronous>, transform_indices = @transform_1, window_bounds = array<i64: 16, 32>}, {pipeline_mode = #tpu.pipeline_mode<synchronous>, transform_indices = @transform_2, window_bounds = array<i64: 1, 32>}, {pipeline_mode = #tpu.pipeline_mode<synchronous>, transform_indices = @transform_3, window_bounds = array<i64: 8, 32>}, {pipeline_mode = #tpu.pipeline_mode<synchronous>, transform_indices = @transform_4, window_bounds = array<i64: 5, 128, 32>}, {pipeline_mode = #tpu.pipeline_mode<synchronous>, transform_indices = @transform_5, window_bounds = array<i64: 5, 8, 32>}, {transform_indices = @transform_6, window_bounds = array<i64: 3, 8, 32>}]} {
    %c0 = arith.constant 0 : index
    %c0_0 = arith.constant 0 : index
    %c0_1 = arith.constant 0 : index
    %0 = vector.load %arg1[%c0, %c0_0, %c0_1] : memref<3x8x16xf32, #tpu.memory_space<vmem>>, vector<3x8x16xf32>
    %1 = vector.shape_cast %0 : vector<3x8x16xf32> to vector<24x16xf32>
    %c0_2 = arith.constant 0 : index
    %c0_3 = arith.constant 0 : index
    %2 = vector.load %arg2[%c0_2, %c0_3] : memref<16x32xf32, #tpu.memory_space<vmem>>, vector<16x32xf32>
    %cst = arith.constant dense<0.000000e+00> : vector<24x32xf32>
    %3 = tpu.matmul %1, %2, %cst {dimension_numbers = #tpu.dot_dimension_numbers<[1], [0], [0], [1], [0, 0, 1, 1], [], []>} : vector<24x16xf32>, vector<16x32xf32>, vector<24x32xf32> -> vector<24x32xf32>
    %c0_4 = arith.constant 0 : index
    %c0_5 = arith.constant 0 : index
    %4 = vector.load %arg3[%c0_4, %c0_5] : memref<1x32xf32, #tpu.memory_space<vmem>>, vector<1x32xf32>
    %5 = vector.broadcast %4 : vector<1x32xf32> to vector<24x32xf32>
    %6 = arith.addf %3, %5 : vector<24x32xf32>
    %7 = vector.shape_cast %6 : vector<24x32xf32> to vector<3x8x32xf32>
    %c0_6 = arith.constant 0 : index
    %c0_7 = arith.constant 0 : index
    %8 = vector.load %arg4[%c0_6, %c0_7] : memref<8x32xf32, #tpu.memory_space<vmem>>, vector<8x32xf32>
    %9 = vector.shape_cast %8 : vector<8x32xf32> to vector<1x8x32xf32>
    %10 = vector.broadcast %9 : vector<1x8x32xf32> to vector<3x8x32xf32>
    %11 = arith.addf %7, %10 : vector<3x8x32xf32>
    %12 = vector.shape_cast %11 : vector<3x8x32xf32> to vector<24x32xf32>
    %13 = math.tanh %12 : vector<24x32xf32>
    %cst_8 = arith.constant 1.000000e+00 : f32
    %14 = vector.broadcast %cst_8 : f32 to vector<24x32xf32>
    %cst_9 = arith.constant 0.285714298 : f32
    %15 = vector.broadcast %cst_9 : f32 to vector<24x32xf32>
    %16 = arith.mulf %15, %13 : vector<24x32xf32>
    %cst_10 = arith.constant 1.000000e+00 : f32
    %17 = vector.broadcast %cst_10 : f32 to vector<24x32xf32>
    %18 = arith.subf %17, %16 : vector<24x32xf32>
    %cst_11 = arith.constant 3.500000e+00 : f32
    %19 = vector.broadcast %cst_11 : f32 to vector<24x32xf32>
    %20 = arith.subf %19, %13 : vector<24x32xf32>
    %21 = arith.mulf %20, %18 : vector<24x32xf32>
    %cst_12 = arith.constant 1.100000e+00 : f32
    %22 = vector.broadcast %cst_12 : f32 to vector<24x32xf32>
    %23 = arith.mulf %22, %14 : vector<24x32xf32>
    %24 = arith.subf %21, %23 : vector<24x32xf32>
    %cst_13 = arith.constant 0.416666657 : f32
    %25 = vector.broadcast %cst_13 : f32 to vector<24x32xf32>
    %26 = arith.mulf %24, %25 : vector<24x32xf32>
    %cst_14 = arith.constant 3.500000e+00 : f32
    %27 = vector.broadcast %cst_14 : f32 to vector<24x32xf32>
    %28 = arith.subf %27, %13 : vector<24x32xf32>
    %29 = arith.mulf %28, %26 : vector<24x32xf32>
    %cst_15 = arith.constant 1.71428573 : f32
    %30 = vector.broadcast %cst_15 : f32 to vector<24x32xf32>
    %31 = arith.mulf %30, %18 : vector<24x32xf32>
    %32 = arith.subf %29, %31 : vector<24x32xf32>
    %cst_16 = arith.constant 5.600000e-01 : f32
    %33 = vector.broadcast %cst_16 : f32 to vector<24x32xf32>
    %34 = arith.mulf %32, %33 : vector<24x32xf32>
    %35 = tpu.concatenate %14, %18, %26, %34 in 1 : vector<24x32xf32>, vector<24x32xf32>, vector<24x32xf32>, vector<24x32xf32> -> vector<24x128xf32>
    %c0_17 = arith.constant 0 : index
    %c0_18 = arith.constant 0 : index
    %c0_19 = arith.constant 0 : index
    %36 = vector.load %arg5[%c0_17, %c0_18, %c0_19] : memref<5x128x32xf32, #tpu.memory_space<vmem>>, vector<1x128x32xf32>
    %37 = vector.shape_cast %36 : vector<1x128x32xf32> to vector<128x32xf32>
    %cst_20 = arith.constant dense<0.000000e+00> : vector<24x32xf32>
    %38 = tpu.matmul %35, %37, %cst_20 {dimension_numbers = #tpu.dot_dimension_numbers<[1], [0], [0], [1], [0, 0, 1, 1], [], []>} : vector<24x128xf32>, vector<128x32xf32>, vector<24x32xf32> -> vector<24x32xf32>
    %39 = vector.shape_cast %38 : vector<24x32xf32> to vector<3x8x32xf32>
    %40 = math.tanh %39 : vector<3x8x32xf32>
    %cst_21 = arith.constant 1.000000e+00 : f32
    %41 = vector.broadcast %cst_21 : f32 to vector<3x8x32xf32>
    %cst_22 = arith.constant 0.285714298 : f32
    %42 = vector.broadcast %cst_22 : f32 to vector<3x8x32xf32>
    %43 = arith.mulf %42, %40 : vector<3x8x32xf32>
    %cst_23 = arith.constant 1.000000e+00 : f32
    %44 = vector.broadcast %cst_23 : f32 to vector<3x8x32xf32>
    %45 = arith.subf %44, %43 : vector<3x8x32xf32>
    %cst_24 = arith.constant 3.500000e+00 : f32
    %46 = vector.broadcast %cst_24 : f32 to vector<3x8x32xf32>
    %47 = arith.subf %46, %40 : vector<3x8x32xf32>
    %48 = arith.mulf %47, %45 : vector<3x8x32xf32>
    %cst_25 = arith.constant 1.100000e+00 : f32
    %49 = vector.broadcast %cst_25 : f32 to vector<3x8x32xf32>
    %50 = arith.mulf %49, %41 : vector<3x8x32xf32>
    %51 = arith.subf %48, %50 : vector<3x8x32xf32>
    %cst_26 = arith.constant 0.416666657 : f32
    %52 = vector.broadcast %cst_26 : f32 to vector<3x8x32xf32>
    %53 = arith.mulf %51, %52 : vector<3x8x32xf32>
    %cst_27 = arith.constant 3.500000e+00 : f32
    %54 = vector.broadcast %cst_27 : f32 to vector<3x8x32xf32>
    %55 = arith.subf %54, %40 : vector<3x8x32xf32>
    %56 = arith.mulf %55, %53 : vector<3x8x32xf32>
    %cst_28 = arith.constant 1.71428573 : f32
    %57 = vector.broadcast %cst_28 : f32 to vector<3x8x32xf32>
    %58 = arith.mulf %57, %45 : vector<3x8x32xf32>
    %59 = arith.subf %56, %58 : vector<3x8x32xf32>
    %cst_29 = arith.constant 5.600000e-01 : f32
    %60 = vector.broadcast %cst_29 : f32 to vector<3x8x32xf32>
    %61 = arith.mulf %59, %60 : vector<3x8x32xf32>
    %62 = tpu.concatenate %41, %45, %53, %61 in 1 : vector<3x8x32xf32>, vector<3x8x32xf32>, vector<3x8x32xf32>, vector<3x8x32xf32> -> vector<3x32x32xf32>
    %c0_30 = arith.constant 0 : index
    %c0_31 = arith.constant 0 : index
    %c0_32 = arith.constant 0 : index
    %63 = vector.load %arg6[%c0_30, %c0_31, %c0_32] : memref<5x8x32xf32, #tpu.memory_space<vmem>>, vector<1x8x32xf32>
    %64 = vector.shape_cast %63 : vector<1x8x32xf32> to vector<8x32xf32>
    %65 = vector.shape_cast %64 : vector<8x32xf32> to vector<1x8x32xf32>
    %66 = vector.broadcast %65 : vector<1x8x32xf32> to vector<3x8x32xf32>
    %cst_33 = arith.constant dense<0.000000e+00> : vector<3x8x32xf32>
    %67 = tpu.matmul %66, %62, %cst_33 {dimension_numbers = #tpu.dot_dimension_numbers<[2], [1], [1], [2], [0, 0, 0, 1, 1, 2], [0], [0]>} : vector<3x8x32xf32>, vector<3x32x32xf32>, vector<3x8x32xf32> -> vector<3x8x32xf32>
    %68 = arith.addf %11, %67 : vector<3x8x32xf32>
    %69 = vector.shape_cast %68 : vector<3x8x32xf32> to vector<24x32xf32>
    %70 = math.tanh %69 : vector<24x32xf32>
    %cst_34 = arith.constant 1.000000e+00 : f32
    %71 = vector.broadcast %cst_34 : f32 to vector<24x32xf32>
    %cst_35 = arith.constant 0.285714298 : f32
    %72 = vector.broadcast %cst_35 : f32 to vector<24x32xf32>
    %73 = arith.mulf %72, %70 : vector<24x32xf32>
    %cst_36 = arith.constant 1.000000e+00 : f32
    %74 = vector.broadcast %cst_36 : f32 to vector<24x32xf32>
    %75 = arith.subf %74, %73 : vector<24x32xf32>
    %cst_37 = arith.constant 3.500000e+00 : f32
    %76 = vector.broadcast %cst_37 : f32 to vector<24x32xf32>
    %77 = arith.subf %76, %70 : vector<24x32xf32>
    %78 = arith.mulf %77, %75 : vector<24x32xf32>
    %cst_38 = arith.constant 1.100000e+00 : f32
    %79 = vector.broadcast %cst_38 : f32 to vector<24x32xf32>
    %80 = arith.mulf %79, %71 : vector<24x32xf32>
    %81 = arith.subf %78, %80 : vector<24x32xf32>
    %cst_39 = arith.constant 0.416666657 : f32
    %82 = vector.broadcast %cst_39 : f32 to vector<24x32xf32>
    %83 = arith.mulf %81, %82 : vector<24x32xf32>
    %cst_40 = arith.constant 3.500000e+00 : f32
    %84 = vector.broadcast %cst_40 : f32 to vector<24x32xf32>
    %85 = arith.subf %84, %70 : vector<24x32xf32>
    %86 = arith.mulf %85, %83 : vector<24x32xf32>
    %cst_41 = arith.constant 1.71428573 : f32
    %87 = vector.broadcast %cst_41 : f32 to vector<24x32xf32>
    %88 = arith.mulf %87, %75 : vector<24x32xf32>
    %89 = arith.subf %86, %88 : vector<24x32xf32>
    %cst_42 = arith.constant 5.600000e-01 : f32
    %90 = vector.broadcast %cst_42 : f32 to vector<24x32xf32>
    %91 = arith.mulf %89, %90 : vector<24x32xf32>
    %92 = tpu.concatenate %71, %75, %83, %91 in 1 : vector<24x32xf32>, vector<24x32xf32>, vector<24x32xf32>, vector<24x32xf32> -> vector<24x128xf32>
    %c1 = arith.constant 1 : index
    %c0_43 = arith.constant 0 : index
    %c0_44 = arith.constant 0 : index
    %93 = vector.load %arg5[%c1, %c0_43, %c0_44] : memref<5x128x32xf32, #tpu.memory_space<vmem>>, vector<1x128x32xf32>
    %94 = vector.shape_cast %93 : vector<1x128x32xf32> to vector<128x32xf32>
    %cst_45 = arith.constant dense<0.000000e+00> : vector<24x32xf32>
    %95 = tpu.matmul %92, %94, %cst_45 {dimension_numbers = #tpu.dot_dimension_numbers<[1], [0], [0], [1], [0, 0, 1, 1], [], []>} : vector<24x128xf32>, vector<128x32xf32>, vector<24x32xf32> -> vector<24x32xf32>
    %96 = vector.shape_cast %95 : vector<24x32xf32> to vector<3x8x32xf32>
    %97 = math.tanh %96 : vector<3x8x32xf32>
    %cst_46 = arith.constant 1.000000e+00 : f32
    %98 = vector.broadcast %cst_46 : f32 to vector<3x8x32xf32>
    %cst_47 = arith.constant 0.285714298 : f32
    %99 = vector.broadcast %cst_47 : f32 to vector<3x8x32xf32>
    %100 = arith.mulf %99, %97 : vector<3x8x32xf32>
    %cst_48 = arith.constant 1.000000e+00 : f32
    %101 = vector.broadcast %cst_48 : f32 to vector<3x8x32xf32>
    %102 = arith.subf %101, %100 : vector<3x8x32xf32>
    %cst_49 = arith.constant 3.500000e+00 : f32
    %103 = vector.broadcast %cst_49 : f32 to vector<3x8x32xf32>
    %104 = arith.subf %103, %97 : vector<3x8x32xf32>
    %105 = arith.mulf %104, %102 : vector<3x8x32xf32>
    %cst_50 = arith.constant 1.100000e+00 : f32
    %106 = vector.broadcast %cst_50 : f32 to vector<3x8x32xf32>
    %107 = arith.mulf %106, %98 : vector<3x8x32xf32>
    %108 = arith.subf %105, %107 : vector<3x8x32xf32>
    %cst_51 = arith.constant 0.416666657 : f32
    %109 = vector.broadcast %cst_51 : f32 to vector<3x8x32xf32>
    %110 = arith.mulf %108, %109 : vector<3x8x32xf32>
    %cst_52 = arith.constant 3.500000e+00 : f32
    %111 = vector.broadcast %cst_52 : f32 to vector<3x8x32xf32>
    %112 = arith.subf %111, %97 : vector<3x8x32xf32>
    %113 = arith.mulf %112, %110 : vector<3x8x32xf32>
    %cst_53 = arith.constant 1.71428573 : f32
    %114 = vector.broadcast %cst_53 : f32 to vector<3x8x32xf32>
    %115 = arith.mulf %114, %102 : vector<3x8x32xf32>
    %116 = arith.subf %113, %115 : vector<3x8x32xf32>
    %cst_54 = arith.constant 5.600000e-01 : f32
    %117 = vector.broadcast %cst_54 : f32 to vector<3x8x32xf32>
    %118 = arith.mulf %116, %117 : vector<3x8x32xf32>
    %119 = tpu.concatenate %98, %102, %110, %118 in 1 : vector<3x8x32xf32>, vector<3x8x32xf32>, vector<3x8x32xf32>, vector<3x8x32xf32> -> vector<3x32x32xf32>
    %c1_55 = arith.constant 1 : index
    %c0_56 = arith.constant 0 : index
    %c0_57 = arith.constant 0 : index
    %120 = vector.load %arg6[%c1_55, %c0_56, %c0_57] : memref<5x8x32xf32, #tpu.memory_space<vmem>>, vector<1x8x32xf32>
    %121 = vector.shape_cast %120 : vector<1x8x32xf32> to vector<8x32xf32>
    %122 = vector.shape_cast %121 : vector<8x32xf32> to vector<1x8x32xf32>
    %123 = vector.broadcast %122 : vector<1x8x32xf32> to vector<3x8x32xf32>
    %cst_58 = arith.constant dense<0.000000e+00> : vector<3x8x32xf32>
    %124 = tpu.matmul %123, %119, %cst_58 {dimension_numbers = #tpu.dot_dimension_numbers<[2], [1], [1], [2], [0, 0, 0, 1, 1, 2], [0], [0]>} : vector<3x8x32xf32>, vector<3x32x32xf32>, vector<3x8x32xf32> -> vector<3x8x32xf32>
    %125 = arith.addf %68, %124 : vector<3x8x32xf32>
    %126 = vector.shape_cast %125 : vector<3x8x32xf32> to vector<24x32xf32>
    %127 = math.tanh %126 : vector<24x32xf32>
    %cst_59 = arith.constant 1.000000e+00 : f32
    %128 = vector.broadcast %cst_59 : f32 to vector<24x32xf32>
    %cst_60 = arith.constant 0.285714298 : f32
    %129 = vector.broadcast %cst_60 : f32 to vector<24x32xf32>
    %130 = arith.mulf %129, %127 : vector<24x32xf32>
    %cst_61 = arith.constant 1.000000e+00 : f32
    %131 = vector.broadcast %cst_61 : f32 to vector<24x32xf32>
    %132 = arith.subf %131, %130 : vector<24x32xf32>
    %cst_62 = arith.constant 3.500000e+00 : f32
    %133 = vector.broadcast %cst_62 : f32 to vector<24x32xf32>
    %134 = arith.subf %133, %127 : vector<24x32xf32>
    %135 = arith.mulf %134, %132 : vector<24x32xf32>
    %cst_63 = arith.constant 1.100000e+00 : f32
    %136 = vector.broadcast %cst_63 : f32 to vector<24x32xf32>
    %137 = arith.mulf %136, %128 : vector<24x32xf32>
    %138 = arith.subf %135, %137 : vector<24x32xf32>
    %cst_64 = arith.constant 0.416666657 : f32
    %139 = vector.broadcast %cst_64 : f32 to vector<24x32xf32>
    %140 = arith.mulf %138, %139 : vector<24x32xf32>
    %cst_65 = arith.constant 3.500000e+00 : f32
    %141 = vector.broadcast %cst_65 : f32 to vector<24x32xf32>
    %142 = arith.subf %141, %127 : vector<24x32xf32>
    %143 = arith.mulf %142, %140 : vector<24x32xf32>
    %cst_66 = arith.constant 1.71428573 : f32
    %144 = vector.broadcast %cst_66 : f32 to vector<24x32xf32>
    %145 = arith.mulf %144, %132 : vector<24x32xf32>
    %146 = arith.subf %143, %145 : vector<24x32xf32>
    %cst_67 = arith.constant 5.600000e-01 : f32
    %147 = vector.broadcast %cst_67 : f32 to vector<24x32xf32>
    %148 = arith.mulf %146, %147 : vector<24x32xf32>
    %149 = tpu.concatenate %128, %132, %140, %148 in 1 : vector<24x32xf32>, vector<24x32xf32>, vector<24x32xf32>, vector<24x32xf32> -> vector<24x128xf32>
    %c2 = arith.constant 2 : index
    %c0_68 = arith.constant 0 : index
    %c0_69 = arith.constant 0 : index
    %150 = vector.load %arg5[%c2, %c0_68, %c0_69] : memref<5x128x32xf32, #tpu.memory_space<vmem>>, vector<1x128x32xf32>
    %151 = vector.shape_cast %150 : vector<1x128x32xf32> to vector<128x32xf32>
    %cst_70 = arith.constant dense<0.000000e+00> : vector<24x32xf32>
    %152 = tpu.matmul %149, %151, %cst_70 {dimension_numbers = #tpu.dot_dimension_numbers<[1], [0], [0], [1], [0, 0, 1, 1], [], []>} : vector<24x128xf32>, vector<128x32xf32>, vector<24x32xf32> -> vector<24x32xf32>
    %153 = vector.shape_cast %152 : vector<24x32xf32> to vector<3x8x32xf32>
    %154 = math.tanh %153 : vector<3x8x32xf32>
    %cst_71 = arith.constant 1.000000e+00 : f32
    %155 = vector.broadcast %cst_71 : f32 to vector<3x8x32xf32>
    %cst_72 = arith.constant 0.285714298 : f32
    %156 = vector.broadcast %cst_72 : f32 to vector<3x8x32xf32>
    %157 = arith.mulf %156, %154 : vector<3x8x32xf32>
    %cst_73 = arith.constant 1.000000e+00 : f32
    %158 = vector.broadcast %cst_73 : f32 to vector<3x8x32xf32>
    %159 = arith.subf %158, %157 : vector<3x8x32xf32>
    %cst_74 = arith.constant 3.500000e+00 : f32
    %160 = vector.broadcast %cst_74 : f32 to vector<3x8x32xf32>
    %161 = arith.subf %160, %154 : vector<3x8x32xf32>
    %162 = arith.mulf %161, %159 : vector<3x8x32xf32>
    %cst_75 = arith.constant 1.100000e+00 : f32
    %163 = vector.broadcast %cst_75 : f32 to vector<3x8x32xf32>
    %164 = arith.mulf %163, %155 : vector<3x8x32xf32>
    %165 = arith.subf %162, %164 : vector<3x8x32xf32>
    %cst_76 = arith.constant 0.416666657 : f32
    %166 = vector.broadcast %cst_76 : f32 to vector<3x8x32xf32>
    %167 = arith.mulf %165, %166 : vector<3x8x32xf32>
    %cst_77 = arith.constant 3.500000e+00 : f32
    %168 = vector.broadcast %cst_77 : f32 to vector<3x8x32xf32>
    %169 = arith.subf %168, %154 : vector<3x8x32xf32>
    %170 = arith.mulf %169, %167 : vector<3x8x32xf32>
    %cst_78 = arith.constant 1.71428573 : f32
    %171 = vector.broadcast %cst_78 : f32 to vector<3x8x32xf32>
    %172 = arith.mulf %171, %159 : vector<3x8x32xf32>
    %173 = arith.subf %170, %172 : vector<3x8x32xf32>
    %cst_79 = arith.constant 5.600000e-01 : f32
    %174 = vector.broadcast %cst_79 : f32 to vector<3x8x32xf32>
    %175 = arith.mulf %173, %174 : vector<3x8x32xf32>
    %176 = tpu.concatenate %155, %159, %167, %175 in 1 : vector<3x8x32xf32>, vector<3x8x32xf32>, vector<3x8x32xf32>, vector<3x8x32xf32> -> vector<3x32x32xf32>
    %c2_80 = arith.constant 2 : index
    %c0_81 = arith.constant 0 : index
    %c0_82 = arith.constant 0 : index
    %177 = vector.load %arg6[%c2_80, %c0_81, %c0_82] : memref<5x8x32xf32, #tpu.memory_space<vmem>>, vector<1x8x32xf32>
    %178 = vector.shape_cast %177 : vector<1x8x32xf32> to vector<8x32xf32>
    %179 = vector.shape_cast %178 : vector<8x32xf32> to vector<1x8x32xf32>
    %180 = vector.broadcast %179 : vector<1x8x32xf32> to vector<3x8x32xf32>
    %cst_83 = arith.constant dense<0.000000e+00> : vector<3x8x32xf32>
    %181 = tpu.matmul %180, %176, %cst_83 {dimension_numbers = #tpu.dot_dimension_numbers<[2], [1], [1], [2], [0, 0, 0, 1, 1, 2], [0], [0]>} : vector<3x8x32xf32>, vector<3x32x32xf32>, vector<3x8x32xf32> -> vector<3x8x32xf32>
    %182 = arith.addf %125, %181 : vector<3x8x32xf32>
    %183 = vector.shape_cast %182 : vector<3x8x32xf32> to vector<24x32xf32>
    %184 = math.tanh %183 : vector<24x32xf32>
    %cst_84 = arith.constant 1.000000e+00 : f32
    %185 = vector.broadcast %cst_84 : f32 to vector<24x32xf32>
    %cst_85 = arith.constant 0.285714298 : f32
    %186 = vector.broadcast %cst_85 : f32 to vector<24x32xf32>
    %187 = arith.mulf %186, %184 : vector<24x32xf32>
    %cst_86 = arith.constant 1.000000e+00 : f32
    %188 = vector.broadcast %cst_86 : f32 to vector<24x32xf32>
    %189 = arith.subf %188, %187 : vector<24x32xf32>
    %cst_87 = arith.constant 3.500000e+00 : f32
    %190 = vector.broadcast %cst_87 : f32 to vector<24x32xf32>
    %191 = arith.subf %190, %184 : vector<24x32xf32>
    %192 = arith.mulf %191, %189 : vector<24x32xf32>
    %cst_88 = arith.constant 1.100000e+00 : f32
    %193 = vector.broadcast %cst_88 : f32 to vector<24x32xf32>
    %194 = arith.mulf %193, %185 : vector<24x32xf32>
    %195 = arith.subf %192, %194 : vector<24x32xf32>
    %cst_89 = arith.constant 0.416666657 : f32
    %196 = vector.broadcast %cst_89 : f32 to vector<24x32xf32>
    %197 = arith.mulf %195, %196 : vector<24x32xf32>
    %cst_90 = arith.constant 3.500000e+00 : f32
    %198 = vector.broadcast %cst_90 : f32 to vector<24x32xf32>
    %199 = arith.subf %198, %184 : vector<24x32xf32>
    %200 = arith.mulf %199, %197 : vector<24x32xf32>
    %cst_91 = arith.constant 1.71428573 : f32
    %201 = vector.broadcast %cst_91 : f32 to vector<24x32xf32>
    %202 = arith.mulf %201, %189 : vector<24x32xf32>
    %203 = arith.subf %200, %202 : vector<24x32xf32>
    %cst_92 = arith.constant 5.600000e-01 : f32
    %204 = vector.broadcast %cst_92 : f32 to vector<24x32xf32>
    %205 = arith.mulf %203, %204 : vector<24x32xf32>
    %206 = tpu.concatenate %185, %189, %197, %205 in 1 : vector<24x32xf32>, vector<24x32xf32>, vector<24x32xf32>, vector<24x32xf32> -> vector<24x128xf32>
    %c3 = arith.constant 3 : index
    %c0_93 = arith.constant 0 : index
    %c0_94 = arith.constant 0 : index
    %207 = vector.load %arg5[%c3, %c0_93, %c0_94] : memref<5x128x32xf32, #tpu.memory_space<vmem>>, vector<1x128x32xf32>
    %208 = vector.shape_cast %207 : vector<1x128x32xf32> to vector<128x32xf32>
    %cst_95 = arith.constant dense<0.000000e+00> : vector<24x32xf32>
    %209 = tpu.matmul %206, %208, %cst_95 {dimension_numbers = #tpu.dot_dimension_numbers<[1], [0], [0], [1], [0, 0, 1, 1], [], []>} : vector<24x128xf32>, vector<128x32xf32>, vector<24x32xf32> -> vector<24x32xf32>
    %210 = vector.shape_cast %209 : vector<24x32xf32> to vector<3x8x32xf32>
    %211 = math.tanh %210 : vector<3x8x32xf32>
    %cst_96 = arith.constant 1.000000e+00 : f32
    %212 = vector.broadcast %cst_96 : f32 to vector<3x8x32xf32>
    %cst_97 = arith.constant 0.285714298 : f32
    %213 = vector.broadcast %cst_97 : f32 to vector<3x8x32xf32>
    %214 = arith.mulf %213, %211 : vector<3x8x32xf32>
    %cst_98 = arith.constant 1.000000e+00 : f32
    %215 = vector.broadcast %cst_98 : f32 to vector<3x8x32xf32>
    %216 = arith.subf %215, %214 : vector<3x8x32xf32>
    %cst_99 = arith.constant 3.500000e+00 : f32
    %217 = vector.broadcast %cst_99 : f32 to vector<3x8x32xf32>
    %218 = arith.subf %217, %211 : vector<3x8x32xf32>
    %219 = arith.mulf %218, %216 : vector<3x8x32xf32>
    %cst_100 = arith.constant 1.100000e+00 : f32
    %220 = vector.broadcast %cst_100 : f32 to vector<3x8x32xf32>
    %221 = arith.mulf %220, %212 : vector<3x8x32xf32>
    %222 = arith.subf %219, %221 : vector<3x8x32xf32>
    %cst_101 = arith.constant 0.416666657 : f32
    %223 = vector.broadcast %cst_101 : f32 to vector<3x8x32xf32>
    %224 = arith.mulf %222, %223 : vector<3x8x32xf32>
    %cst_102 = arith.constant 3.500000e+00 : f32
    %225 = vector.broadcast %cst_102 : f32 to vector<3x8x32xf32>
    %226 = arith.subf %225, %211 : vector<3x8x32xf32>
    %227 = arith.mulf %226, %224 : vector<3x8x32xf32>
    %cst_103 = arith.constant 1.71428573 : f32
    %228 = vector.broadcast %cst_103 : f32 to vector<3x8x32xf32>
    %229 = arith.mulf %228, %216 : vector<3x8x32xf32>
    %230 = arith.subf %227, %229 : vector<3x8x32xf32>
    %cst_104 = arith.constant 5.600000e-01 : f32
    %231 = vector.broadcast %cst_104 : f32 to vector<3x8x32xf32>
    %232 = arith.mulf %230, %231 : vector<3x8x32xf32>
    %233 = tpu.concatenate %212, %216, %224, %232 in 1 : vector<3x8x32xf32>, vector<3x8x32xf32>, vector<3x8x32xf32>, vector<3x8x32xf32> -> vector<3x32x32xf32>
    %c3_105 = arith.constant 3 : index
    %c0_106 = arith.constant 0 : index
    %c0_107 = arith.constant 0 : index
    %234 = vector.load %arg6[%c3_105, %c0_106, %c0_107] : memref<5x8x32xf32, #tpu.memory_space<vmem>>, vector<1x8x32xf32>
    %235 = vector.shape_cast %234 : vector<1x8x32xf32> to vector<8x32xf32>
    %236 = vector.shape_cast %235 : vector<8x32xf32> to vector<1x8x32xf32>
    %237 = vector.broadcast %236 : vector<1x8x32xf32> to vector<3x8x32xf32>
    %cst_108 = arith.constant dense<0.000000e+00> : vector<3x8x32xf32>
    %238 = tpu.matmul %237, %233, %cst_108 {dimension_numbers = #tpu.dot_dimension_numbers<[2], [1], [1], [2], [0, 0, 0, 1, 1, 2], [0], [0]>} : vector<3x8x32xf32>, vector<3x32x32xf32>, vector<3x8x32xf32> -> vector<3x8x32xf32>
    %239 = arith.addf %182, %238 : vector<3x8x32xf32>
    %240 = vector.shape_cast %239 : vector<3x8x32xf32> to vector<24x32xf32>
    %241 = math.tanh %240 : vector<24x32xf32>
    %cst_109 = arith.constant 1.000000e+00 : f32
    %242 = vector.broadcast %cst_109 : f32 to vector<24x32xf32>
    %cst_110 = arith.constant 0.285714298 : f32
    %243 = vector.broadcast %cst_110 : f32 to vector<24x32xf32>
    %244 = arith.mulf %243, %241 : vector<24x32xf32>
    %cst_111 = arith.constant 1.000000e+00 : f32
    %245 = vector.broadcast %cst_111 : f32 to vector<24x32xf32>
    %246 = arith.subf %245, %244 : vector<24x32xf32>
    %cst_112 = arith.constant 3.500000e+00 : f32
    %247 = vector.broadcast %cst_112 : f32 to vector<24x32xf32>
    %248 = arith.subf %247, %241 : vector<24x32xf32>
    %249 = arith.mulf %248, %246 : vector<24x32xf32>
    %cst_113 = arith.constant 1.100000e+00 : f32
    %250 = vector.broadcast %cst_113 : f32 to vector<24x32xf32>
    %251 = arith.mulf %250, %242 : vector<24x32xf32>
    %252 = arith.subf %249, %251 : vector<24x32xf32>
    %cst_114 = arith.constant 0.416666657 : f32
    %253 = vector.broadcast %cst_114 : f32 to vector<24x32xf32>
    %254 = arith.mulf %252, %253 : vector<24x32xf32>
    %cst_115 = arith.constant 3.500000e+00 : f32
    %255 = vector.broadcast %cst_115 : f32 to vector<24x32xf32>
    %256 = arith.subf %255, %241 : vector<24x32xf32>
    %257 = arith.mulf %256, %254 : vector<24x32xf32>
    %cst_116 = arith.constant 1.71428573 : f32
    %258 = vector.broadcast %cst_116 : f32 to vector<24x32xf32>
    %259 = arith.mulf %258, %246 : vector<24x32xf32>
    %260 = arith.subf %257, %259 : vector<24x32xf32>
    %cst_117 = arith.constant 5.600000e-01 : f32
    %261 = vector.broadcast %cst_117 : f32 to vector<24x32xf32>
    %262 = arith.mulf %260, %261 : vector<24x32xf32>
    %263 = tpu.concatenate %242, %246, %254, %262 in 1 : vector<24x32xf32>, vector<24x32xf32>, vector<24x32xf32>, vector<24x32xf32> -> vector<24x128xf32>
    %c4 = arith.constant 4 : index
    %c0_118 = arith.constant 0 : index
    %c0_119 = arith.constant 0 : index
    %264 = vector.load %arg5[%c4, %c0_118, %c0_119] : memref<5x128x32xf32, #tpu.memory_space<vmem>>, vector<1x128x32xf32>
    %265 = vector.shape_cast %264 : vector<1x128x32xf32> to vector<128x32xf32>
    %cst_120 = arith.constant dense<0.000000e+00> : vector<24x32xf32>
    %266 = tpu.matmul %263, %265, %cst_120 {dimension_numbers = #tpu.dot_dimension_numbers<[1], [0], [0], [1], [0, 0, 1, 1], [], []>} : vector<24x128xf32>, vector<128x32xf32>, vector<24x32xf32> -> vector<24x32xf32>
    %267 = vector.shape_cast %266 : vector<24x32xf32> to vector<3x8x32xf32>
    %268 = math.tanh %267 : vector<3x8x32xf32>
    %cst_121 = arith.constant 1.000000e+00 : f32
    %269 = vector.broadcast %cst_121 : f32 to vector<3x8x32xf32>
    %cst_122 = arith.constant 0.285714298 : f32
    %270 = vector.broadcast %cst_122 : f32 to vector<3x8x32xf32>
    %271 = arith.mulf %270, %268 : vector<3x8x32xf32>
    %cst_123 = arith.constant 1.000000e+00 : f32
    %272 = vector.broadcast %cst_123 : f32 to vector<3x8x32xf32>
    %273 = arith.subf %272, %271 : vector<3x8x32xf32>
    %cst_124 = arith.constant 3.500000e+00 : f32
    %274 = vector.broadcast %cst_124 : f32 to vector<3x8x32xf32>
    %275 = arith.subf %274, %268 : vector<3x8x32xf32>
    %276 = arith.mulf %275, %273 : vector<3x8x32xf32>
    %cst_125 = arith.constant 1.100000e+00 : f32
    %277 = vector.broadcast %cst_125 : f32 to vector<3x8x32xf32>
    %278 = arith.mulf %277, %269 : vector<3x8x32xf32>
    %279 = arith.subf %276, %278 : vector<3x8x32xf32>
    %cst_126 = arith.constant 0.416666657 : f32
    %280 = vector.broadcast %cst_126 : f32 to vector<3x8x32xf32>
    %281 = arith.mulf %279, %280 : vector<3x8x32xf32>
    %cst_127 = arith.constant 3.500000e+00 : f32
    %282 = vector.broadcast %cst_127 : f32 to vector<3x8x32xf32>
    %283 = arith.subf %282, %268 : vector<3x8x32xf32>
    %284 = arith.mulf %283, %281 : vector<3x8x32xf32>
    %cst_128 = arith.constant 1.71428573 : f32
    %285 = vector.broadcast %cst_128 : f32 to vector<3x8x32xf32>
    %286 = arith.mulf %285, %273 : vector<3x8x32xf32>
    %287 = arith.subf %284, %286 : vector<3x8x32xf32>
    %cst_129 = arith.constant 5.600000e-01 : f32
    %288 = vector.broadcast %cst_129 : f32 to vector<3x8x32xf32>
    %289 = arith.mulf %287, %288 : vector<3x8x32xf32>
    %290 = tpu.concatenate %269, %273, %281, %289 in 1 : vector<3x8x32xf32>, vector<3x8x32xf32>, vector<3x8x32xf32>, vector<3x8x32xf32> -> vector<3x32x32xf32>
    %c4_130 = arith.constant 4 : index
    %c0_131 = arith.constant 0 : index
    %c0_132 = arith.constant 0 : index
    %291 = vector.load %arg6[%c4_130, %c0_131, %c0_132] : memref<5x8x32xf32, #tpu.memory_space<vmem>>, vector<1x8x32xf32>
    %292 = vector.shape_cast %291 : vector<1x8x32xf32> to vector<8x32xf32>
    %293 = vector.shape_cast %292 : vector<8x32xf32> to vector<1x8x32xf32>
    %294 = vector.broadcast %293 : vector<1x8x32xf32> to vector<3x8x32xf32>
    %cst_133 = arith.constant dense<0.000000e+00> : vector<3x8x32xf32>
    %295 = tpu.matmul %294, %290, %cst_133 {dimension_numbers = #tpu.dot_dimension_numbers<[2], [1], [1], [2], [0, 0, 0, 1, 1, 2], [0], [0]>} : vector<3x8x32xf32>, vector<3x32x32xf32>, vector<3x8x32xf32> -> vector<3x8x32xf32>
    %296 = arith.addf %239, %295 : vector<3x8x32xf32>
    %c0_134 = arith.constant 0 : index
    %c0_135 = arith.constant 0 : index
    %c0_136 = arith.constant 0 : index
    %297 = vector.load %arg7[%c0_134, %c0_135, %c0_136] : memref<3x8x32xf32, #tpu.memory_space<vmem>>, vector<3x8x32xf32>
    tpu.vector_store %arg7[%c0_134, %c0_135, %c0_136], %296 {strides = array<i32>} : memref<3x8x32xf32, #tpu.memory_space<vmem>>, vector<3x8x32xf32>,
    return
  }
  func.func @transform_0(%arg0: i32) -> (i32, i32, i32) {
    %c0_i32 = arith.constant 0 : i32
    %c0_i32_0 = arith.constant 0 : i32
    %c0_i32_1 = arith.constant 0 : i32
    return %arg0, %c0_i32, %c0_i32_0 : i32, i32, i32
  }
  func.func @transform_1(%arg0: i32) -> (i32, i32) {
    %c0_i32 = arith.constant 0 : i32
    %c0_i32_0 = arith.constant 0 : i32
    %c0_i32_1 = arith.constant 0 : i32
    return %c0_i32, %c0_i32_0 : i32, i32
  }
  func.func @transform_2(%arg0: i32) -> (i32, i32) {
    %c0_i32 = arith.constant 0 : i32
    %c0_i32_0 = arith.constant 0 : i32
    %c0_i32_1 = arith.constant 0 : i32
    return %c0_i32, %c0_i32_0 : i32, i32
  }
  func.func @transform_3(%arg0: i32) -> (i32, i32) {
    %c0_i32 = arith.constant 0 : i32
    %c0_i32_0 = arith.constant 0 : i32
    %c0_i32_1 = arith.constant 0 : i32
    return %c0_i32, %c0_i32_0 : i32, i32
  }
  func.func @transform_4(%arg0: i32) -> (i32, i32, i32) {
    %c0_i32 = arith.constant 0 : i32
    %c0_i32_0 = arith.constant 0 : i32
    %c0_i32_1 = arith.constant 0 : i32
    %c0_i32_2 = arith.constant 0 : i32
    return %c0_i32, %c0_i32_0, %c0_i32_1 : i32, i32, i32
  }
  func.func @transform_5(%arg0: i32) -> (i32, i32, i32) {
    %c0_i32 = arith.constant 0 : i32
    %c0_i32_0 = arith.constant 0 : i32
    %c0_i32_1 = arith.constant 0 : i32
    %c0_i32_2 = arith.constant 0 : i32
    return %c0_i32, %c0_i32_0, %c0_i32_1 : i32, i32, i32
  }
  func.func @transform_6(%arg0: i32) -> (i32, i32, i32) {
    %c0_i32 = arith.constant 0 : i32
    %c0_i32_0 = arith.constant 0 : i32
    %c0_i32_1 = arith.constant 0 : i32
    return %arg0, %c0_i32, %c0_i32_0 : i32, i32, i32
  }
}

</mosaic_0001>

<llo_original>
// kernel: backbone_forward.1
$region0: #{backbone_forward.1}
  #allocation0 [shape = 'u32[]', space=smem, size = 0x4, offset = 0x4, fixed_abs, tag = 'smem constant byte address 0x4 - core index']
  #allocation1 [shape = 'u32[144,128]{1,0:T(1,128)}', space=vmem, size = 0x12000, scoped, tag = 'internal scratch']
  %s0 = inlined_call_operand.vmem [shape: f32[6,8,16], index: 0, kind: input, shape index: {}]
  %s1 = inlined_call_operand.vmem [shape: f32[16,32], index: 1, kind: input, shape index: {}]
  %s2 = inlined_call_operand.vmem [shape: f32[1,32], index: 2, kind: input, shape index: {}]
  %s3 = inlined_call_operand.vmem [shape: f32[8,32], index: 3, kind: input, shape index: {}]
  %s4 = inlined_call_operand.vmem [shape: f32[5,128,32], index: 4, kind: input, shape index: {}]
  %s5 = inlined_call_operand.vmem [shape: f32[5,8,32], index: 5, kind: input, shape index: {}]
  %s6 = inlined_call_operand.hbm [shape: f32[6,8,32], index: 6, kind: output, shape index: {}]
  %s7 = sld [smem:[#allocation0]]
  $region57: #{backbone_forward.1} parent=0
    _
  %s9 = ssub.s32 1, %s7
  %s10 = scalar_select 0, %s9, %s7
  $region1: #{backbone_forward.1} parent=0
    #allocation2 [shape = 'u8[24576]{0}', space=vmem, size = 0x6000, scoped, tag = 'output window, operand 0']
    #allocation3 [shape = 's32[2]{0}', space=sflag, size = 0x8, scoped, tag = 'scoped memory for backbone_forward.1']
    %11 = vsyncpa [#allocation3], 0
    %s12 = scalar_lea.sflag [#allocation3], 1
    %13 = vsyncpa %s12, 0
    loop: start=0, step=1, limit=4
    $region2: #{backbone_forward.1} parent=1 // loop_pre_header
      _
    $region3: #{backbone_forward.1} parent=1 // loop_header
      %s15 = sphi 0, %s19
      %p16 = scmp.ge.s32.totalorder %s15, 4
      %s25 = sphi 0, %s27
      %s28 = sphi 0, %s25
      %s29 = sphi 0, %s28
      %s45 = sphi 0, %s29
      %s49 = sphi 0, %s49
      %s51 = sphi 0, %s49
      %s52 = sphi 0, %s51
      %s66 = sphi 0, %s52
      %s70 = sphi 0, %s70
      %s72 = sphi 0, %s70
      %s73 = sphi 0, %s72
      %s87 = sphi 0, %s73
      %s91 = sphi 0, %s91
      %s93 = sphi 0, %s91
      %s94 = sphi 0, %s93
      %s108 = sphi 0, %s94
      %s112 = sphi 0, %s112
      %s114 = sphi 0, %s112
      %s115 = sphi 0, %s114
      %s129 = sphi 0, %s115
      %s133 = sphi 0, %s133
      %s135 = sphi 0, %s133
      %s136 = sphi 0, %s135
      %s150 = sphi 0, %s136
      %s156 = sphi 0, %s158
      %s159 = sphi 0, %s156
      %s160 = sphi 0, %s159
      %s176 = sphi 0, %s160
    $region4: #{backbone_forward.1} parent=1 // loop_header_branch
      %18 = sbr.rel (%p16) target = $region8
    $region5: #{backbone_forward.1} parent=1 // loop_body
      %s20 = ssub.s32 %s15, 1
      %s21 = ssub.s32 %s15, 2
      %s22 = sadd.s32 %s15, 1
      %s23 = ssub.s32 %s15, %s22
      %p24 = scmp.eq.s32.totalorder %s23, 0
      %s26 = sadd.s32 %s25, 1
      %s27 = scalar_select %p24, %s25, %s26
      %p30 = pneg %p24
      %p31 = scmp.eq.s32.totalorder %s15, 1
      %p32 = por %p30, %p31
      %p33 = scmp.ne.s32.totalorder %s25, %s28
      %p34 = scmp.eq.s32.totalorder %s15, 0
      %p35 = por %p33, %p34
      %p36 = scmp.ne.s32.totalorder %s25, %s28
      %p37 = scmp.eq.s32.totalorder %s20, 1
      %p38 = por %p36, %p37
      %p39 = scmp.ne.s32.totalorder %s28, %s29
      %p40 = scmp.eq.s32.totalorder %s20, 0
      %p41 = por %p39, %p40
      %p42 = scmp.ne.s32.totalorder %s28, %s29
      %p43 = scmp.eq.s32.totalorder %s21, 1
      %p44 = por %p42, %p43
      %p46 = scmp.ne.s32.totalorder %s29, %s45
      %p47 = scmp.eq.s32.totalorder %s21, 0
      %p48 = por %p46, %p47
      %s50 = sadd.s32 %s49, 1
      %p53 = scmp.eq.s32.totalorder %s15, 1
      %p54 = scmp.ne.s32.totalorder %s49, %s51
      %p55 = scmp.eq.s32.totalorder %s15, 0
      %p56 = por %p54, %p55
      %p57 = scmp.ne.s32.totalorder %s49, %s51
      %p58 = scmp.eq.s32.totalorder %s20, 1
      %p59 = por %p57, %p58
      %p60 = scmp.ne.s32.totalorder %s51, %s52
      %p61 = scmp.eq.s32.totalorder %s20, 0
      %p62 = por %p60, %p61
      %p63 = scmp.ne.s32.totalorder %s51, %s52
      %p64 = scmp.eq.s32.totalorder %s21, 1
      %p65 = por %p63, %p64
      %p67 = scmp.ne.s32.totalorder %s52, %s66
      %p68 = scmp.eq.s32.totalorder %s21, 0
      %p69 = por %p67, %p68
      %s71 = sadd.s32 %s70, 1
      %p74 = scmp.eq.s32.totalorder %s15, 1
      %p75 = scmp.ne.s32.totalorder %s70, %s72
      %p76 = scmp.eq.s32.totalorder %s15, 0
      %p77 = por %p75, %p76
      %p78 = scmp.ne.s32.totalorder %s70, %s72
      %p79 = scmp.eq.s32.totalorder %s20, 1
      %p80 = por %p78, %p79
      %p81 = scmp.ne.s32.totalorder %s72, %s73
      %p82 = scmp.eq.s32.totalorder %s20, 0
      %p83 = por %p81, %p82
      %p84 = scmp.ne.s32.totalorder %s72, %s73
      %p85 = scmp.eq.s32.totalorder %s21, 1
      %p86 = por %p84, %p85
      %p88 = scmp.ne.s32.totalorder %s73, %s87
      %p89 = scmp.eq.s32.totalorder %s21, 0
      %p90 = por %p88, %p89
      %s92 = sadd.s32 %s91, 1
      %p95 = scmp.eq.s32.totalorder %s15, 1
      %p96 = scmp.ne.s32.totalorder %s91, %s93
      %p97 = scmp.eq.s32.totalorder %s15, 0
      %p98 = por %p96, %p97
      %p99 = scmp.ne.s32.totalorder %s91, %s93
      %p100 = scmp.eq.s32.totalorder %s20, 1
      %p101 = por %p99, %p100
      %p102 = scmp.ne.s32.totalorder %s93, %s94
      %p103 = scmp.eq.s32.totalorder %s20, 0
      %p104 = por %p102, %p103
      %p105 = scmp.ne.s32.totalorder %s93, %s94
      %p106 = scmp.eq.s32.totalorder %s21, 1
      %p107 = por %p105, %p106
      %p109 = scmp.ne.s32.totalorder %s94, %s108
      %p110 = scmp.eq.s32.totalorder %s21, 0
      %p111 = por %p109, %p110
      %s113 = sadd.s32 %s112, 1
      %p116 = scmp.eq.s32.totalorder %s15, 1
      %p117 = scmp.ne.s32.totalorder %s112, %s114
      %p118 = scmp.eq.s32.totalorder %s15, 0
      %p119 = por %p117, %p118
      %p120 = scmp.ne.s32.totalorder %s112, %s114
      %p121 = scmp.eq.s32.totalorder %s20, 1
      %p122 = por %p120, %p121
      %p123 = scmp.ne.s32.totalorder %s114, %s115
      %p124 = scmp.eq.s32.totalorder %s20, 0
      %p125 = por %p123, %p124
      %p126 = scmp.ne.s32.totalorder %s114, %s115
      %p127 = scmp.eq.s32.totalorder %s21, 1
      %p128 = por %p126, %p127
      %p130 = scmp.ne.s32.totalorder %s115, %s129
      %p131 = scmp.eq.s32.totalorder %s21, 0
      %p132 = por %p130, %p131
      %s134 = sadd.s32 %s133, 1
      %p137 = scmp.eq.s32.totalorder %s15, 1
      %p138 = scmp.ne.s32.totalorder %s133, %s135
      %p139 = scmp.eq.s32.totalorder %s15, 0
      %p140 = por %p138, %p139
      %p141 = scmp.ne.s32.totalorder %s133, %s135
      %p142 = scmp.eq.s32.totalorder %s20, 1
      %p143 = por %p141, %p142
      %p144 = scmp.ne.s32.totalorder %s135, %s136
      %p145 = scmp.eq.s32.totalorder %s20, 0
      %p146 = por %p144, %p145
      %p147 = scmp.ne.s32.totalorder %s135, %s136
      %p148 = scmp.eq.s32.totalorder %s21, 1
      %p149 = por %p147, %p148
      %p151 = scmp.ne.s32.totalorder %s136, %s150
      %p152 = scmp.eq.s32.totalorder %s21, 0
      %p153 = por %p151, %p152
      %s154 = ssub.s32 %s15, %s22
      %p155 = scmp.eq.s32.totalorder %s154, 0
      %s157 = sadd.s32 %s156, 1
      %s158 = scalar_select %p155, %s156, %s157
      %p161 = pneg %p155
      %p162 = scmp.eq.s32.totalorder %s15, 1
      %p163 = por %p161, %p162
      %p164 = scmp.ne.s32.totalorder %s156, %s159
      %p165 = scmp.eq.s32.totalorder %s15, 0
      %p166 = por %p164, %p165
      %p167 = scmp.ne.s32.totalorder %s156, %s159
      %p168 = scmp.eq.s32.totalorder %s20, 1
      %p169 = por %p167, %p168
      %p170 = scmp.ne.s32.totalorder %s159, %s160
      %p171 = scmp.eq.s32.totalorder %s20, 0
      %p172 = por %p170, %p171
      %p173 = scmp.ne.s32.totalorder %s159, %s160
      %p174 = scmp.eq.s32.totalorder %s21, 1
      %p175 = por %p173, %p174
      %p177 = scmp.ne.s32.totalorder %s160, %s176
      %p178 = scmp.eq.s32.totalorder %s21, 0
      %p179 = por %p177, %p178
      %p180 = scmp.le.s32.totalorder 1, %s15
      %p181 = scmp.lt.s32.totalorder %s15, 3
      %p182 = pnand %p180, %p181
      %p183 = pneg %p182
      // Predicated region
      $region9: #{backbone_forward.1} parent=5 // pred_check
        _
      $region10: #{backbone_forward.1} parent=5 // pred_check_branch
        %185 = sbr.rel (%p182) target = $region12
      $region11: #{backbone_forward.1} parent=5 // pred_region
        %s186 = ssub.s32 %s15, 1
        // Predicated region
        $region13: #{backbone_forward.1} parent=11 // pred_check
          %p187 = pneg %p62
        $region14: #{backbone_forward.1} parent=11 // pred_check_branch
          %189 = sbr.rel (%p187) target = $region16
        $region15: #{backbone_forward.1} parent=11 // pred_region
          _
        $region16: #{backbone_forward.1} parent=11 // pred_fallthru
          _
        // Predicated region
        $region17: #{backbone_forward.1} parent=11 // pred_check
          %p190 = pneg %p83
        $region18: #{backbone_forward.1} parent=11 // pred_check_branch
          %192 = sbr.rel (%p190) target = $region20
        $region19: #{backbone_forward.1} parent=11 // pred_region
          _
        $region20: #{backbone_forward.1} parent=11 // pred_fallthru
          _
        // Predicated region
        $region21: #{backbone_forward.1} parent=11 // pred_check
          %p193 = pneg %p104
        $region22: #{backbone_forward.1} parent=11 // pred_check_branch
          %195 = sbr.rel (%p193) target = $region24
        $region23: #{backbone_forward.1} parent=11 // pred_region
          _
        $region24: #{backbone_forward.1} parent=11 // pred_fallthru
          _
        // Predicated region
        $region25: #{backbone_forward.1} parent=11 // pred_check
          %p196 = pneg %p125
        $region26: #{backbone_forward.1} parent=11 // pred_check_branch
          %198 = sbr.rel (%p196) target = $region28
        $region27: #{backbone_forward.1} parent=11 // pred_region
          _
        $region28: #{backbone_forward.1} parent=11 // pred_fallthru
          _
        // Predicated region
        $region29: #{backbone_forward.1} parent=11 // pred_check
          %p199 = pneg %p146
        $region30: #{backbone_forward.1} parent=11 // pred_check_branch
          %201 = sbr.rel (%p199) target = $region32
        $region31: #{backbone_forward.1} parent=11 // pred_region
          _
        $region32: #{backbone_forward.1} parent=11 // pred_fallthru
          _
      $region12: #{backbone_forward.1} parent=5 // pred_fallthru
        _
      %p202 = scmp.lt.s32.totalorder %s15, 2
      // Predicated region
      $region33: #{backbone_forward.1} parent=5 // pred_check
        %p203 = pneg %p202
      $region34: #{backbone_forward.1} parent=5 // pred_check_branch
        %205 = sbr.rel (%p203) target = $region36
      $region35: #{backbone_forward.1} parent=5 // pred_region
        // Predicated region
        $region37: #{backbone_forward.1} parent=35 // pred_check
          %p206 = pneg %p35
        $region38: #{backbone_forward.1} parent=35 // pred_check_branch
          %208 = sbr.rel (%p206) target = $region40
        $region39: #{backbone_forward.1} parent=35 // pred_region
          %s209 = smul.u32 3, %s15
          %p210 = scmp.lt.s32.totalorder %s209, 5
          %s211 = scalar_select %p210, %s209, 5
          %s212 = smul.addr %s211, 8
          %s213 = scalar_lea.vmem %s0, %s212
          %s214 = smul.u32 3, %s15
        $region40: #{backbone_forward.1} parent=35 // pred_fallthru
          _
      $region36: #{backbone_forward.1} parent=5 // pred_fallthru
        _
      %p215 = scmp.le.s32.totalorder 1, %s15
      %p216 = scmp.lt.s32.totalorder %s15, 3
      %p217 = pnand %p215, %p216
      %p218 = pneg %p217
      // Predicated region
      $region41: #{backbone_forward.1} parent=5 // pred_check
        _
      $region42: #{backbone_forward.1} parent=5 // pred_check_branch
        %220 = sbr.rel (%p217) target = $region44
      $region43: #{backbone_forward.1} parent=5 // pred_region
        %s221 = ssub.s32 %s15, 1
        %s222 = smul.u32 3, %s20
        %p223 = scmp.lt.s32.totalorder %s222, 5
        %s224 = scalar_select %p223, %s222, 5
        %s225 = smul.addr %s224, 8
        %s226 = scalar_lea.vmem %s0, %s225
        %p227 = pneg %p41
        %p228 = pneg %p38
        %p229 = pneg %p62
        %p230 = pneg %p59
        %p231 = pneg %p83
        %p232 = pneg %p80
        %p233 = pneg %p104
        %p234 = pneg %p101
        %p235 = pneg %p125
        %p236 = pneg %p122
        %p237 = pneg %p146
        %p238 = pneg %p143
        %p239 = pneg %p172
        %p240 = pneg %p169
        %s241 = sand.u32 %s159, 1
        %s242 = scalar_lea.sflag [#allocation3], %s241
        %s243 = sand.u32 %s159, 1
        %s244 = smul.addr %s243, 24
        %s245 = scalar_lea.vmem [#allocation2], %s244
        %s246 = smul.u32 3, %s20
        %p247 = scmp.lt.s32.totalorder %s246, 5
        %s248 = scalar_select %p247, %s246, 5
        %s249 = smul.addr %s248, 8
        %s250 = scalar_lea.vmem %s0, %s249
        %s251 = smul.u32 3, %s20
        %s252 = smul.u32 3, %s20
        %v253 = vld [vmem:[%s250] sm:$0xff]
        %v254 = vld [vmem:[%s250 + $0x8] sm:$0xff]
        %v255 = vld [vmem:[%s250 + $0x10] sm:$0xff]
        %v256 = vld [vmem:[%s1] sm:$0xff]
        %v257 = vld [vmem:[%s1 + $0x8] sm:$0xff]
        %v258 = vld [vmem:[%s2] sm:$0x1]
        %v260 = vlaneseq
        %v261 = vshrl.u32 %v260, 7
        %v262 = vsub.s32 0, %v261
        %v263 = vrot.slane %v258, %v262
        %vm265 = vcmask 130048
        %v267 = vsel %vm265, %v253, 0
        %v270 = vsel %vm265, %v254, 0
        %v273 = vsel %vm265, %v255, 0
        %275 = vmatprep.subr.mxu0 0.0
        %276 = vmatpush1.msra.mxu0 0.0
        %277 = vmatprep.subr.mxu0 0.0
        %278 = vmatpush1.msra.mxu0 0.0
        %279 = vmatprep.subr.mxu0 0.0
        %280 = vmatpush1.msra.mxu0 0.0
        %281 = vmatprep.subr.mxu0 0.0
        %282 = vmatpush1.msra.mxu0 0.0
        %283 = vmatprep.subr.mxu0 0.0
        %284 = vmatpush1.msra.mxu0 0.0
        %285 = vmatprep.subr.mxu0 0.0
        %286 = vmatpush1.msra.mxu0 0.0
        %287 = vmatprep.subr.mxu0 0.0
        %288 = vmatpush1.msra.mxu0 0.0
        %289 = vmatprep.subr.mxu0 0.0
        %290 = vmatpush1.msra.mxu0 0.0
        %291 = vmatprep.subr.mxu0 0.0
        %292 = vmatpush1.msra.mxu0 0.0
        %293 = vmatprep.subr.mxu0 0.0
        %294 = vmatpush1.msra.mxu0 0.0
        %295 = vmatprep.subr.mxu0 0.0
        %296 = vmatpush1.msra.mxu0 0.0
        %297 = vmatprep.subr.mxu0 0.0
        %298 = vmatpush1.msra.mxu0 0.0
        %299 = vmatprep.subr.mxu0 0.0
        %300 = vmatpush1.msra.mxu0 0.0
        %301 = vmatprep.subr.mxu0 0.0
        %302 = vmatpush1.msra.mxu0 0.0
        %303 = vmatprep.subr.mxu0 0.0
        %304 = vmatpush1.msra.mxu0 %v257
        %305 = vmatprep.subr.mxu0 0.0
        %306 = vmatpush1.msra.mxu0 %v256
        %307 = vmatprep.subr.mxu0 0.0
        %308 = vmatpush2.msra.mxu0 0.0
        %309 = vmatprep.subr.mxu0 0.0
        %310 = vmatpush2.msra.mxu0 0.0
        %311 = vmatprep.subr.mxu0 0.0
        %312 = vmatpush2.msra.mxu0 0.0
        %313 = vmatprep.subr.mxu0 0.0
        %314 = vmatpush2.msra.mxu0 0.0
        %315 = vmatprep.subr.mxu0 0.0
        %316 = vmatpush2.msra.mxu0 0.0
        %317 = vmatprep.subr.mxu0 0.0
        %318 = vmatpush2.msra.mxu0 0.0
        %319 = vmatprep.subr.mxu0 0.0
        %320 = vmatpush2.msra.mxu0 0.0
        %321 = vmatprep.subr.mxu0 0.0
        %322 = vmatpush2.msra.mxu0 0.0
        %323 = vmatprep.subr.mxu0 0.0
        %324 = vmatpush2.msra.mxu0 0.0
        %325 = vmatprep.subr.mxu0 0.0
        %326 = vmatpush2.msra.mxu0 0.0
        %327 = vmatprep.subr.mxu0 0.0
        %328 = vmatpush2.msra.mxu0 0.0
        %329 = vmatprep.subr.mxu0 0.0
        %330 = vmatpush2.msra.mxu0 0.0
        %331 = vmatprep.subr.mxu0 0.0
        %332 = vmatpush2.msra.mxu0 0.0
        %333 = vmatprep.subr.mxu0 0.0
        %334 = vmatpush2.msra.mxu0 0.0
        %335 = vmatprep.subr.mxu0 0.0
        %336 = vmatpush2.msra.mxu0 0.0
        %337 = vmatprep.subr.mxu0 0.0
        %338 = vmatpush2.msra.mxu0 0.0
        %339 = vmatprep.mubr.f32.mxu0 0.0
        %340 = vmatmul.mubr.f32.gmra.mxu0 %v267
        %v341 = vpop.f32.mrf.mxu0
        %v342 = vadd.f32 %v263, %v341
        %v343 = vpop.f32.mrf.mxu0
        %344 = vmatprep.mubr.f32.mxu0 0.0
        %345 = vmatmul.mubr.f32.gmra.mxu0 %v270
        %v346 = vpop.f32.mrf.mxu0
        %v347 = vadd.f32 %v263, %v346
        %v348 = vpop.f32.mrf.mxu0
        %349 = vmatprep.mubr.f32.mxu0 0.0
        %350 = vmatmul.mubr.f32.gmra.mxu0 %v273
        %v351 = vpop.f32.mrf.mxu0
        %v352 = vadd.f32 %v263, %v351
        %v353 = vpop.f32.mrf.mxu0
        %354 = vdwg.mxu0
        %v355 = vld [vmem:[%s3] sm:$0xff]
        %v356 = vadd.f32 %v342, %v355
        %v357 = vadd.f32 %v347, %v355
        %v358 = vadd.f32 %v352, %v355
        %v359 = vtanh.pop %v356
        %v360 = vtanh.pop %v357
        %v361 = vtanh.pop %v358
        %v362 = vmul.f32 %v359, 0.2857143
        %v363 = vmul.f32 %v360, 0.2857143
        %v364 = vmul.f32 %v361, 0.2857143
        %v365 = vsub.f32 1.0, %v362
        %v366 = vsub.f32 1.0, %v363
        %v367 = vsub.f32 1.0, %v364
        %v368 = vsub.f32 3.5, %v359
        %v369 = vsub.f32 3.5, %v360
        %v370 = vsub.f32 3.5, %v361
        %v371 = vmul.f32 %v368, %v365
        %v372 = vmul.f32 %v369, %v366
        %v373 = vmul.f32 %v370, %v367
        %v374 = vsub.f32 %v371, 1.1
        %v375 = vsub.f32 %v372, 1.1
        %v376 = vsub.f32 %v373, 1.1
        %v377 = vmul.f32 %v374, 0.41666666
        %v378 = vmul.f32 %v375, 0.41666666
        %v379 = vmul.f32 %v376, 0.41666666
        %v380 = vmul.f32 %v368, %v377
        %v381 = vmul.f32 %v369, %v378
        %v382 = vmul.f32 %v370, %v379
        %v383 = vmul.f32 %v365, 1.7142857
        %v384 = vmul.f32 %v366, 1.7142857
        %v385 = vmul.f32 %v367, 1.7142857
        %v386 = vsub.f32 %v380, %v383
        %v387 = vsub.f32 %v381, %v384
        %v388 = vsub.f32 %v382, %v385
        %v389 = vmul.f32 %v386, 0.56
        %v390 = vmul.f32 %v387, 0.56
        %v391 = vmul.f32 %v388, 0.56
        %395 = vrot.lane.b32.xlu0 %v365, 32
        %v396 = vpop.permute.xlu0 %395
        %397 = vrot.lane.b32.xlu0 %v366, 32
        %v398 = vpop.permute.xlu0 %397
        %399 = vrot.lane.b32.xlu0 %v367, 32
        %v400 = vpop.permute.xlu0 %399
        %407 = vrot.lane.b32.xlu0 %v377, 64
        %v408 = vpop.permute.xlu0 %407
        %409 = vrot.lane.b32.xlu0 %v378, 64
        %v410 = vpop.permute.xlu0 %409
        %411 = vrot.lane.b32.xlu0 %v379, 64
        %v412 = vpop.permute.xlu0 %411
        %419 = vrot.lane.b32.xlu0 %v389, 96
        %v420 = vpop.permute.xlu0 %419
        %421 = vrot.lane.b32.xlu0 %v390, 96
        %v422 = vpop.permute.xlu0 %421
        %423 = vrot.lane.b32.xlu0 %v391, 96
        %v424 = vpop.permute.xlu0 %423
        %vm428 = vcmask 261120
        %v429 = vsel %vm428, 1.0, %v396
        %v430 = vsel %vm428, 1.0, %v398
        %v431 = vsel %vm428, 1.0, %v400
        %vm432 = vcmask 523264
        %v433 = vsel %vm432, %v429, %v408
        %v434 = vsel %vm432, %v430, %v410
        %v435 = vsel %vm432, %v431, %v412
        %vm436 = vcmask 785408
        %v437 = vsel %vm436, %v433, %v420
        %v438 = vsel %vm436, %v434, %v422
        %v439 = vsel %vm436, %v435, %v424
        %v440 = vld [vmem:[%s4] sm:$0xff]
        %v441 = vld [vmem:[%s4 + $0x8] sm:$0xff]
        %v442 = vld [vmem:[%s4 + $0x10] sm:$0xff]
        %v443 = vld [vmem:[%s4 + $0x18] sm:$0xff]
        %v444 = vld [vmem:[%s4 + $0x20] sm:$0xff]
        %v445 = vld [vmem:[%s4 + $0x28] sm:$0xff]
        %v446 = vld [vmem:[%s4 + $0x30] sm:$0xff]
        %v447 = vld [vmem:[%s4 + $0x38] sm:$0xff]
        %v448 = vld [vmem:[%s4 + $0x40] sm:$0xff]
        %v449 = vld [vmem:[%s4 + $0x48] sm:$0xff]
        %v450 = vld [vmem:[%s4 + $0x50] sm:$0xff]
        %v451 = vld [vmem:[%s4 + $0x58] sm:$0xff]
        %v452 = vld [vmem:[%s4 + $0x60] sm:$0xff]
        %v453 = vld [vmem:[%s4 + $0x68] sm:$0xff]
        %v454 = vld [vmem:[%s4 + $0x70] sm:$0xff]
        %v455 = vld [vmem:[%s4 + $0x78] sm:$0xff]
        %456 = vmatprep.subr.mxu0 0.0
        %457 = vmatpush1.msra.mxu0 %v455
        %458 = vmatprep.subr.mxu0 0.0
        %459 = vmatpush1.msra.mxu0 %v454
        %460 = vmatprep.subr.mxu0 0.0
        %461 = vmatpush1.msra.mxu0 %v453
        %462 = vmatprep.subr.mxu0 0.0
        %463 = vmatpush1.msra.mxu0 %v452
        %464 = vmatprep.subr.mxu0 0.0
        %465 = vmatpush1.msra.mxu0 %v451
        %466 = vmatprep.subr.mxu0 0.0
        %467 = vmatpush1.msra.mxu0 %v450
        %468 = vmatprep.subr.mxu0 0.0
        %469 = vmatpush1.msra.mxu0 %v449
        %470 = vmatprep.subr.mxu0 0.0
        %471 = vmatpush1.msra.mxu0 %v448
        %472 = vmatprep.subr.mxu0 0.0
        %473 = vmatpush1.msra.mxu0 %v447
        %474 = vmatprep.subr.mxu0 0.0
        %475 = vmatpush1.msra.mxu0 %v446
        %476 = vmatprep.subr.mxu0 0.0
        %477 = vmatpush1.msra.mxu0 %v445
        %478 = vmatprep.subr.mxu0 0.0
        %479 = vmatpush1.msra.mxu0 %v444
        %480 = vmatprep.subr.mxu0 0.0
        %481 = vmatpush1.msra.mxu0 %v443
        %482 = vmatprep.subr.mxu0 0.0
        %483 = vmatpush1.msra.mxu0 %v442
        %484 = vmatprep.subr.mxu0 0.0
        %485 = vmatpush1.msra.mxu0 %v441
        %486 = vmatprep.subr.mxu0 0.0
        %487 = vmatpush1.msra.mxu0 %v440
        %488 = vmatprep.subr.mxu0 0.0
        %489 = vmatpush2.msra.mxu0 0.0
        %490 = vmatprep.subr.mxu0 0.0
        %491 = vmatpush2.msra.mxu0 0.0
        %492 = vmatprep.subr.mxu0 0.0
        %493 = vmatpush2.msra.mxu0 0.0
        %494 = vmatprep.subr.mxu0 0.0
        %495 = vmatpush2.msra.mxu0 0.0
        %496 = vmatprep.subr.mxu0 0.0
        %497 = vmatpush2.msra.mxu0 0.0
        %498 = vmatprep.subr.mxu0 0.0
        %499 = vmatpush2.msra.mxu0 0.0
        %500 = vmatprep.subr.mxu0 0.0
        %501 = vmatpush2.msra.mxu0 0.0
        %502 = vmatprep.subr.mxu0 0.0
        %503 = vmatpush2.msra.mxu0 0.0
        %504 = vmatprep.subr.mxu0 0.0
        %505 = vmatpush2.msra.mxu0 0.0
        %506 = vmatprep.subr.mxu0 0.0
        %507 = vmatpush2.msra.mxu0 0.0
        %508 = vmatprep.subr.mxu0 0.0
        %509 = vmatpush2.msra.mxu0 0.0
        %510 = vmatprep.subr.mxu0 0.0
        %511 = vmatpush2.msra.mxu0 0.0
        %512 = vmatprep.subr.mxu0 0.0
        %513 = vmatpush2.msra.mxu0 0.0
        %514 = vmatprep.subr.mxu0 0.0
        %515 = vmatpush2.msra.mxu0 0.0
        %516 = vmatprep.subr.mxu0 0.0
        %517 = vmatpush2.msra.mxu0 0.0
        %518 = vmatprep.subr.mxu0 0.0
        %519 = vmatpush2.msra.mxu0 0.0
        %520 = vmatprep.mubr.f32.mxu0 0.0
        %521 = vmatmul.mubr.f32.gmra.mxu0 %v437
        %v522 = vpop.f32.mrf.mxu0
        %v523 = vadd.f32 0.0, %v522
        %v524 = vpop.f32.mrf.mxu0
        %525 = vmatprep.mubr.f32.mxu0 0.0
        %526 = vmatmul.mubr.f32.gmra.mxu0 %v438
        %v527 = vpop.f32.mrf.mxu0
        %v528 = vadd.f32 0.0, %v527
        %v529 = vpop.f32.mrf.mxu0
        %530 = vmatprep.mubr.f32.mxu0 0.0
        %531 = vmatmul.mubr.f32.gmra.mxu0 %v439
        %v532 = vpop.f32.mrf.mxu0
        %v533 = vadd.f32 0.0, %v532
        %v534 = vpop.f32.mrf.mxu0
        %535 = vdwg.mxu0
        %v536 = vtanh.pop %v523
        %v537 = vtanh.pop %v528
        %v538 = vtanh.pop %v533
        %v539 = vmul.f32 %v536, 0.2857143
        %v540 = vmul.f32 %v537, 0.2857143
        %v541 = vmul.f32 %v538, 0.2857143
        %v542 = vsub.f32 1.0, %v539
        %v543 = vsub.f32 1.0, %v540
        %v544 = vsub.f32 1.0, %v541
        %v545 = vsub.f32 3.5, %v536
        %v546 = vsub.f32 3.5, %v537
        %v547 = vsub.f32 3.5, %v538
        %v548 = vmul.f32 %v545, %v542
        %v549 = vmul.f32 %v546, %v543
        %v550 = vmul.f32 %v547, %v544
        %v551 = vsub.f32 %v548, 1.1
        %v552 = vsub.f32 %v549, 1.1
        %v553 = vsub.f32 %v550, 1.1
        %v554 = vmul.f32 %v551, 0.41666666
        %v555 = vmul.f32 %v552, 0.41666666
        %v556 = vmul.f32 %v553, 0.41666666
        %v557 = vmul.f32 %v545, %v554
        %v558 = vmul.f32 %v546, %v555
        %v559 = vmul.f32 %v547, %v556
        %v560 = vmul.f32 %v542, 1.7142857
        %v561 = vmul.f32 %v543, 1.7142857
        %v562 = vmul.f32 %v544, 1.7142857
        %v563 = vsub.f32 %v557, %v560
        %v564 = vsub.f32 %v558, %v561
        %v565 = vsub.f32 %v559, %v562
        %v566 = vmul.f32 %v563, 0.56
        %v567 = vmul.f32 %v564, 0.56
        %v568 = vmul.f32 %v565, 0.56
        %v569 = vld [vmem:[%s5] sm:$0xff]
        %v571 = vsel %vm428, %v569, 0
        %573 = vmatprep.subr.mxu0 0.0
        %574 = vmatpush1.msra.mxu0 0.0
        %575 = vmatprep.subr.mxu0 0.0
        %576 = vmatpush1.msra.mxu0 0.0
        %577 = vmatprep.subr.mxu0 0.0
        %578 = vmatpush1.msra.mxu0 0.0
        %579 = vmatprep.subr.mxu0 0.0
        %580 = vmatpush1.msra.mxu0 0.0
        %581 = vmatprep.subr.mxu0 0.0
        %582 = vmatpush1.msra.mxu0 0.0
        %583 = vmatprep.subr.mxu0 0.0
        %584 = vmatpush1.msra.mxu0 0.0
        %585 = vmatprep.subr.mxu0 0.0
        %586 = vmatpush1.msra.mxu0 0.0
        %587 = vmatprep.subr.mxu0 0.0
        %588 = vmatpush1.msra.mxu0 0.0
        %589 = vmatprep.subr.mxu0 0.0
        %590 = vmatpush1.msra.mxu0 0.0
        %591 = vmatprep.subr.mxu0 0.0
        %592 = vmatpush1.msra.mxu0 0.0
        %593 = vmatprep.subr.mxu0 0.0
        %594 = vmatpush1.msra.mxu0 0.0
        %595 = vmatprep.subr.mxu0 0.0
        %596 = vmatpush1.msra.mxu0 0.0
        %597 = vmatprep.subr.mxu0 0.0
        %598 = vmatpush1.msra.mxu0 %v566
        %599 = vmatprep.subr.mxu0 0.0
        %600 = vmatpush1.msra.mxu0 %v554
        %601 = vmatprep.subr.mxu0 0.0
        %602 = vmatpush1.msra.mxu0 %v542
        %603 = vmatprep.subr.mxu0 0.0
        %604 = vmatpush1.msra.mxu0 1.0
        %605 = vmatprep.subr.mxu0 0.0
        %606 = vmatpush2.msra.mxu0 0.0
        %607 = vmatprep.subr.mxu0 0.0
        %608 = vmatpush2.msra.mxu0 0.0
        %609 = vmatprep.subr.mxu0 0.0
        %610 = vmatpush2.msra.mxu0 0.0
        %611 = vmatprep.subr.mxu0 0.0
        %612 = vmatpush2.msra.mxu0 0.0
        %613 = vmatprep.subr.mxu0 0.0
        %614 = vmatpush2.msra.mxu0 0.0
        %615 = vmatprep.subr.mxu0 0.0
        %616 = vmatpush2.msra.mxu0 0.0
        %617 = vmatprep.subr.mxu0 0.0
        %618 = vmatpush2.msra.mxu0 0.0
        %619 = vmatprep.subr.mxu0 0.0
        %620 = vmatpush2.msra.mxu0 0.0
        %621 = vmatprep.subr.mxu0 0.0
        %622 = vmatpush2.msra.mxu0 0.0
        %623 = vmatprep.subr.mxu0 0.0
        %624 = vmatpush2.msra.mxu0 0.0
        %625 = vmatprep.subr.mxu0 0.0
        %626 = vmatpush2.msra.mxu0 0.0
        %627 = vmatprep.subr.mxu0 0.0
        %628 = vmatpush2.msra.mxu0 0.0
        %629 = vmatprep.subr.mxu0 0.0
        %630 = vmatpush2.msra.mxu0 0.0
        %631 = vmatprep.subr.mxu0 0.0
        %632 = vmatpush2.msra.mxu0 0.0
        %633 = vmatprep.subr.mxu0 0.0
        %634 = vmatpush2.msra.mxu0 0.0
        %635 = vmatprep.subr.mxu0 0.0
        %636 = vmatpush2.msra.mxu0 0.0
        %637 = vmatprep.mubr.f32.mxu0 0.0
        %638 = vmatmul.mubr.f32.gmra.mxu0 %v571
        %v639 = vpop.f32.mrf.mxu0
        %v640 = vadd.f32 0.0, %v639
        %v641 = vpop.f32.mrf.mxu0
        %642 = vdwg.mxu0
        %643 = vmatprep.subr.mxu0 0.0
        %644 = vmatpush1.msra.mxu0 0.0
        %645 = vmatprep.subr.mxu0 0.0
        %646 = vmatpush1.msra.mxu0 0.0
        %647 = vmatprep.subr.mxu0 0.0
        %648 = vmatpush1.msra.mxu0 0.0
        %649 = vmatprep.subr.mxu0 0.0
        %650 = vmatpush1.msra.mxu0 0.0
        %651 = vmatprep.subr.mxu0 0.0
        %652 = vmatpush1.msra.mxu0 0.0
        %653 = vmatprep.subr.mxu0 0.0
        %654 = vmatpush1.msra.mxu0 0.0
        %655 = vmatprep.subr.mxu0 0.0
        %656 = vmatpush1.msra.mxu0 0.0
        %657 = vmatprep.subr.mxu0 0.0
        %658 = vmatpush1.msra.mxu0 0.0
        %659 = vmatprep.subr.mxu0 0.0
        %660 = vmatpush1.msra.mxu0 0.0
        %661 = vmatprep.subr.mxu0 0.0
        %662 = vmatpush1.msra.mxu0 0.0
        %663 = vmatprep.subr.mxu0 0.0
        %664 = vmatpush1.msra.mxu0 0.0
        %665 = vmatprep.subr.mxu0 0.0
        %666 = vmatpush1.msra.mxu0 0.0
        %667 = vmatprep.subr.mxu0 0.0
        %668 = vmatpush1.msra.mxu0 %v567
        %669 = vmatprep.subr.mxu0 0.0
        %670 = vmatpush1.msra.mxu0 %v555
        %671 = vmatprep.subr.mxu0 0.0
        %672 = vmatpush1.msra.mxu0 %v543
        %673 = vmatprep.subr.mxu0 0.0
        %674 = vmatpush1.msra.mxu0 1.0
        %675 = vmatprep.subr.mxu0 0.0
        %676 = vmatpush2.msra.mxu0 0.0
        %677 = vmatprep.subr.mxu0 0.0
        %678 = vmatpush2.msra.mxu0 0.0
        %679 = vmatprep.subr.mxu0 0.0
        %680 = vmatpush2.msra.mxu0 0.0
        %681 = vmatprep.subr.mxu0 0.0
        %682 = vmatpush2.msra.mxu0 0.0
        %683 = vmatprep.subr.mxu0 0.0
        %684 = vmatpush2.msra.mxu0 0.0
        %685 = vmatprep.subr.mxu0 0.0
        %686 = vmatpush2.msra.mxu0 0.0
        %687 = vmatprep.subr.mxu0 0.0
        %688 = vmatpush2.msra.mxu0 0.0
        %689 = vmatprep.subr.mxu0 0.0
        %690 = vmatpush2.msra.mxu0 0.0
        %691 = vmatprep.subr.mxu0 0.0
        %692 = vmatpush2.msra.mxu0 0.0
        %693 = vmatprep.subr.mxu0 0.0
        %694 = vmatpush2.msra.mxu0 0.0
        %695 = vmatprep.subr.mxu0 0.0
        %696 = vmatpush2.msra.mxu0 0.0
        %697 = vmatprep.subr.mxu0 0.0
        %698 = vmatpush2.msra.mxu0 0.0
        %699 = vmatprep.subr.mxu0 0.0
        %700 = vmatpush2.msra.mxu0 0.0
        %701 = vmatprep.subr.mxu0 0.0
        %702 = vmatpush2.msra.mxu0 0.0
        %703 = vmatprep.subr.mxu0 0.0
        %704 = vmatpush2.msra.mxu0 0.0
        %705 = vmatprep.subr.mxu0 0.0
        %706 = vmatpush2.msra.mxu0 0.0
        %707 = vmatprep.mubr.f32.mxu0 0.0
        %708 = vmatmul.mubr.f32.gmra.mxu0 %v571
        %v709 = vpop.f32.mrf.mxu0
        %v710 = vadd.f32 0.0, %v709
        %v711 = vpop.f32.mrf.mxu0
        %712 = vdwg.mxu0
        %713 = vmatprep.subr.mxu0 0.0
        %714 = vmatpush1.msra.mxu0 0.0
        %715 = vmatprep.subr.mxu0 0.0
        %716 = vmatpush1.msra.mxu0 0.0
        %717 = vmatprep.subr.mxu0 0.0
        %718 = vmatpush1.msra.mxu0 0.0
        %719 = vmatprep.subr.mxu0 0.0
        %720 = vmatpush1.msra.mxu0 0.0
        %721 = vmatprep.subr.mxu0 0.0
        %722 = vmatpush1.msra.mxu0 0.0
        %723 = vmatprep.subr.mxu0 0.0
        %724 = vmatpush1.msra.mxu0 0.0
        %725 = vmatprep.subr.mxu0 0.0
        %726 = vmatpush1.msra.mxu0 0.0
        %727 = vmatprep.subr.mxu0 0.0
        %728 = vmatpush1.msra.mxu0 0.0
        %729 = vmatprep.subr.mxu0 0.0
        %730 = vmatpush1.msra.mxu0 0.0
        %731 = vmatprep.subr.mxu0 0.0
        %732 = vmatpush1.msra.mxu0 0.0
        %733 = vmatprep.subr.mxu0 0.0
        %734 = vmatpush1.msra.mxu0 0.0
        %735 = vmatprep.subr.mxu0 0.0
        %736 = vmatpush1.msra.mxu0 0.0
        %737 = vmatprep.subr.mxu0 0.0
        %738 = vmatpush1.msra.mxu0 %v568
        %739 = vmatprep.subr.mxu0 0.0
        %740 = vmatpush1.msra.mxu0 %v556
        %741 = vmatprep.subr.mxu0 0.0
        %742 = vmatpush1.msra.mxu0 %v544
        %743 = vmatprep.subr.mxu0 0.0
        %744 = vmatpush1.msra.mxu0 1.0
        %745 = vmatprep.subr.mxu0 0.0
        %746 = vmatpush2.msra.mxu0 0.0
        %747 = vmatprep.subr.mxu0 0.0
        %748 = vmatpush2.msra.mxu0 0.0
        %749 = vmatprep.subr.mxu0 0.0
        %750 = vmatpush2.msra.mxu0 0.0
        %751 = vmatprep.subr.mxu0 0.0
        %752 = vmatpush2.msra.mxu0 0.0
        %753 = vmatprep.subr.mxu0 0.0
        %754 = vmatpush2.msra.mxu0 0.0
        %755 = vmatprep.subr.mxu0 0.0
        %756 = vmatpush2.msra.mxu0 0.0
        %757 = vmatprep.subr.mxu0 0.0
        %758 = vmatpush2.msra.mxu0 0.0
        %759 = vmatprep.subr.mxu0 0.0
        %760 = vmatpush2.msra.mxu0 0.0
        %761 = vmatprep.subr.mxu0 0.0
        %762 = vmatpush2.msra.mxu0 0.0
        %763 = vmatprep.subr.mxu0 0.0
        %764 = vmatpush2.msra.mxu0 0.0
        %765 = vmatprep.subr.mxu0 0.0
        %766 = vmatpush2.msra.mxu0 0.0
        %767 = vmatprep.subr.mxu0 0.0
        %768 = vmatpush2.msra.mxu0 0.0
        %769 = vmatprep.subr.mxu0 0.0
        %770 = vmatpush2.msra.mxu0 0.0
        %771 = vmatprep.subr.mxu0 0.0
        %772 = vmatpush2.msra.mxu0 0.0
        %773 = vmatprep.subr.mxu0 0.0
        %774 = vmatpush2.msra.mxu0 0.0
        %775 = vmatprep.subr.mxu0 0.0
        %776 = vmatpush2.msra.mxu0 0.0
        %777 = vmatprep.mubr.f32.mxu0 0.0
        %778 = vmatmul.mubr.f32.gmra.mxu0 %v571
        %v779 = vpop.f32.mrf.mxu0
        %v780 = vadd.f32 0.0, %v779
        %v781 = vpop.f32.mrf.mxu0
        %782 = vdwg.mxu0
        %v783 = vadd.f32 %v356, %v640
        %v784 = vadd.f32 %v357, %v710
        %v785 = vadd.f32 %v358, %v780
        %v786 = vtanh.pop %v783
        %v787 = vtanh.pop %v784
        %v788 = vtanh.pop %v785
        %v789 = vmul.f32 %v786, 0.2857143
        %v790 = vmul.f32 %v787, 0.2857143
        %v791 = vmul.f32 %v788, 0.2857143
        %v792 = vsub.f32 1.0, %v789
        %v793 = vsub.f32 1.0, %v790
        %v794 = vsub.f32 1.0, %v791
        %v795 = vsub.f32 3.5, %v786
        %v796 = vsub.f32 3.5, %v787
        %v797 = vsub.f32 3.5, %v788
        %v798 = vmul.f32 %v795, %v792
        %v799 = vmul.f32 %v796, %v793
        %v800 = vmul.f32 %v797, %v794
        %v801 = vsub.f32 %v798, 1.1
        %v802 = vsub.f32 %v799, 1.1
        %v803 = vsub.f32 %v800, 1.1
        %v804 = vmul.f32 %v801, 0.41666666
        %v805 = vmul.f32 %v802, 0.41666666
        %v806 = vmul.f32 %v803, 0.41666666
        %v807 = vmul.f32 %v795, %v804
        %v808 = vmul.f32 %v796, %v805
        %v809 = vmul.f32 %v797, %v806
        %v810 = vmul.f32 %v792, 1.7142857
        %v811 = vmul.f32 %v793, 1.7142857
        %v812 = vmul.f32 %v794, 1.7142857
        %v813 = vsub.f32 %v807, %v810
        %v814 = vsub.f32 %v808, %v811
        %v815 = vsub.f32 %v809, %v812
        %v816 = vmul.f32 %v813, 0.56
        %v817 = vmul.f32 %v814, 0.56
        %v818 = vmul.f32 %v815, 0.56
        %822 = vrot.lane.b32.xlu0 %v792, 32
        %v823 = vpop.permute.xlu0 %822
        %824 = vrot.lane.b32.xlu0 %v793, 32
        %v825 = vpop.permute.xlu0 %824
        %826 = vrot.lane.b32.xlu0 %v794, 32
        %v827 = vpop.permute.xlu0 %826
        %834 = vrot.lane.b32.xlu0 %v804, 64
        %v835 = vpop.permute.xlu0 %834
        %836 = vrot.lane.b32.xlu0 %v805, 64
        %v837 = vpop.permute.xlu0 %836
        %838 = vrot.lane.b32.xlu0 %v806, 64
        %v839 = vpop.permute.xlu0 %838
        %846 = vrot.lane.b32.xlu0 %v816, 96
        %v847 = vpop.permute.xlu0 %846
        %848 = vrot.lane.b32.xlu0 %v817, 96
        %v849 = vpop.permute.xlu0 %848
        %850 = vrot.lane.b32.xlu0 %v818, 96
        %v851 = vpop.permute.xlu0 %850
        %v855 = vsel %vm428, 1.0, %v823
        %v856 = vsel %vm428, 1.0, %v825
        %v857 = vsel %vm428, 1.0, %v827
        %v858 = vsel %vm432, %v855, %v835
        %v859 = vsel %vm432, %v856, %v837
        %v860 = vsel %vm432, %v857, %v839
        %v861 = vsel %vm436, %v858, %v847
        %v862 = vsel %vm436, %v859, %v849
        %v863 = vsel %vm436, %v860, %v851
        %s864 = scalar_lea.vmem %s4, 128
        %v865 = vld [vmem:[%s864] sm:$0xff]
        %v866 = vld [vmem:[%s864 + $0x8] sm:$0xff]
        %v867 = vld [vmem:[%s864 + $0x10] sm:$0xff]
        %v868 = vld [vmem:[%s864 + $0x18] sm:$0xff]
        %v869 = vld [vmem:[%s864 + $0x20] sm:$0xff]
        %v870 = vld [vmem:[%s864 + $0x28] sm:$0xff]
        %v871 = vld [vmem:[%s864 + $0x30] sm:$0xff]
        %v872 = vld [vmem:[%s864 + $0x38] sm:$0xff]
        %v873 = vld [vmem:[%s864 + $0x40] sm:$0xff]
        %v874 = vld [vmem:[%s864 + $0x48] sm:$0xff]
        %v875 = vld [vmem:[%s864 + $0x50] sm:$0xff]
        %v876 = vld [vmem:[%s864 + $0x58] sm:$0xff]
        %v877 = vld [vmem:[%s864 + $0x60] sm:$0xff]
        %v878 = vld [vmem:[%s864 + $0x68] sm:$0xff]
        %v879 = vld [vmem:[%s864 + $0x70] sm:$0xff]
        %v880 = vld [vmem:[%s864 + $0x78] sm:$0xff]
        %881 = vmatprep.subr.mxu0 0.0
        %882 = vmatpush1.msra.mxu0 %v880
        %883 = vmatprep.subr.mxu0 0.0
        %884 = vmatpush1.msra.mxu0 %v879
        %885 = vmatprep.subr.mxu0 0.0
        %886 = vmatpush1.msra.mxu0 %v878
        %887 = vmatprep.subr.mxu0 0.0
        %888 = vmatpush1.msra.mxu0 %v877
        %889 = vmatprep.subr.mxu0 0.0
        %890 = vmatpush1.msra.mxu0 %v876
        %891 = vmatprep.subr.mxu0 0.0
        %892 = vmatpush1.msra.mxu0 %v875
        %893 = vmatprep.subr.mxu0 0.0
        %894 = vmatpush1.msra.mxu0 %v874
        %895 = vmatprep.subr.mxu0 0.0
        %896 = vmatpush1.msra.mxu0 %v873
        %897 = vmatprep.subr.mxu0 0.0
        %898 = vmatpush1.msra.mxu0 %v872
        %899 = vmatprep.subr.mxu0 0.0
        %900 = vmatpush1.msra.mxu0 %v871
        %901 = vmatprep.subr.mxu0 0.0
        %902 = vmatpush1.msra.mxu0 %v870
        %903 = vmatprep.subr.mxu0 0.0
        %904 = vmatpush1.msra.mxu0 %v869
        %905 = vmatprep.subr.mxu0 0.0
        %906 = vmatpush1.msra.mxu0 %v868
        %907 = vmatprep.subr.mxu0 0.0
        %908 = vmatpush1.msra.mxu0 %v867
        %909 = vmatprep.subr.mxu0 0.0
        %910 = vmatpush1.msra.mxu0 %v866
        %911 = vmatprep.subr.mxu0 0.0
        %912 = vmatpush1.msra.mxu0 %v865
        %913 = vmatprep.subr.mxu0 0.0
        %914 = vmatpush2.msra.mxu0 0.0
        %915 = vmatprep.subr.mxu0 0.0
        %916 = vmatpush2.msra.mxu0 0.0
        %917 = vmatprep.subr.mxu0 0.0
        %918 = vmatpush2.msra.mxu0 0.0
        %919 = vmatprep.subr.mxu0 0.0
        %920 = vmatpush2.msra.mxu0 0.0
        %921 = vmatprep.subr.mxu0 0.0
        %922 = vmatpush2.msra.mxu0 0.0
        %923 = vmatprep.subr.mxu0 0.0
        %924 = vmatpush2.msra.mxu0 0.0
        %925 = vmatprep.subr.mxu0 0.0
        %926 = vmatpush2.msra.mxu0 0.0
        %927 = vmatprep.subr.mxu0 0.0
        %928 = vmatpush2.msra.mxu0 0.0
        %929 = vmatprep.subr.mxu0 0.0
        %930 = vmatpush2.msra.mxu0 0.0
        %931 = vmatprep.subr.mxu0 0.0
        %932 = vmatpush2.msra.mxu0 0.0
        %933 = vmatprep.subr.mxu0 0.0
        %934 = vmatpush2.msra.mxu0 0.0
        %935 = vmatprep.subr.mxu0 0.0
        %936 = vmatpush2.msra.mxu0 0.0
        %937 = vmatprep.subr.mxu0 0.0
        %938 = vmatpush2.msra.mxu0 0.0
        %939 = vmatprep.subr.mxu0 0.0
        %940 = vmatpush2.msra.mxu0 0.0
        %941 = vmatprep.subr.mxu0 0.0
        %942 = vmatpush2.msra.mxu0 0.0
        %943 = vmatprep.subr.mxu0 0.0
        %944 = vmatpush2.msra.mxu0 0.0
        %945 = vmatprep.mubr.f32.mxu0 0.0
        %946 = vmatmul.mubr.f32.gmra.mxu0 %v861
        %v947 = vpop.f32.mrf.mxu0
        %v948 = vadd.f32 0.0, %v947
        %v949 = vpop.f32.mrf.mxu0
        %950 = vmatprep.mubr.f32.mxu0 0.0
        %951 = vmatmul.mubr.f32.gmra.mxu0 %v862
        %v952 = vpop.f32.mrf.mxu0
        %v953 = vadd.f32 0.0, %v952
        %v954 = vpop.f32.mrf.mxu0
        %955 = vmatprep.mubr.f32.mxu0 0.0
        %956 = vmatmul.mubr.f32.gmra.mxu0 %v863
        %v957 = vpop.f32.mrf.mxu0
        %v958 = vadd.f32 0.0, %v957
        %v959 = vpop.f32.mrf.mxu0
        %960 = vdwg.mxu0
        %v961 = vtanh.pop %v948
        %v962 = vtanh.pop %v953
        %v963 = vtanh.pop %v958
        %v964 = vmul.f32 %v961, 0.2857143
        %v965 = vmul.f32 %v962, 0.2857143
        %v966 = vmul.f32 %v963, 0.2857143
        %v967 = vsub.f32 1.0, %v964
        %v968 = vsub.f32 1.0, %v965
        %v969 = vsub.f32 1.0, %v966
        %v970 = vsub.f32 3.5, %v961
        %v971 = vsub.f32 3.5, %v962
        %v972 = vsub.f32 3.5, %v963
        %v973 = vmul.f32 %v970, %v967
        %v974 = vmul.f32 %v971, %v968
        %v975 = vmul.f32 %v972, %v969
        %v976 = vsub.f32 %v973, 1.1
        %v977 = vsub.f32 %v974, 1.1
        %v978 = vsub.f32 %v975, 1.1
        %v979 = vmul.f32 %v976, 0.41666666
        %v980 = vmul.f32 %v977, 0.41666666
        %v981 = vmul.f32 %v978, 0.41666666
        %v982 = vmul.f32 %v970, %v979
        %v983 = vmul.f32 %v971, %v980
        %v984 = vmul.f32 %v972, %v981
        %v985 = vmul.f32 %v967, 1.7142857
        %v986 = vmul.f32 %v968, 1.7142857
        %v987 = vmul.f32 %v969, 1.7142857
        %v988 = vsub.f32 %v982, %v985
        %v989 = vsub.f32 %v983, %v986
        %v990 = vsub.f32 %v984, %v987
        %v991 = vmul.f32 %v988, 0.56
        %v992 = vmul.f32 %v989, 0.56
        %v993 = vmul.f32 %v990, 0.56
        %s994 = scalar_lea.vmem %s5, 8
        %v995 = vld [vmem:[%s994] sm:$0xff]
        %v997 = vsel %vm428, %v995, 0
        %999 = vmatprep.subr.mxu0 0.0
        %1000 = vmatpush1.msra.mxu0 0.0
        %1001 = vmatprep.subr.mxu0 0.0
        %1002 = vmatpush1.msra.mxu0 0.0
        %1003 = vmatprep.subr.mxu0 0.0
        %1004 = vmatpush1.msra.mxu0 0.0
        %1005 = vmatprep.subr.mxu0 0.0
        %1006 = vmatpush1.msra.mxu0 0.0
        %1007 = vmatprep.subr.mxu0 0.0
        %1008 = vmatpush1.msra.mxu0 0.0
        %1009 = vmatprep.subr.mxu0 0.0
        %1010 = vmatpush1.msra.mxu0 0.0
        %1011 = vmatprep.subr.mxu0 0.0
        %1012 = vmatpush1.msra.mxu0 0.0
        %1013 = vmatprep.subr.mxu0 0.0
        %1014 = vmatpush1.msra.mxu0 0.0
        %1015 = vmatprep.subr.mxu0 0.0
        %1016 = vmatpush1.msra.mxu0 0.0
        %1017 = vmatprep.subr.mxu0 0.0
        %1018 = vmatpush1.msra.mxu0 0.0
        %1019 = vmatprep.subr.mxu0 0.0
        %1020 = vmatpush1.msra.mxu0 0.0
        %1021 = vmatprep.subr.mxu0 0.0
        %1022 = vmatpush1.msra.mxu0 0.0
        %1023 = vmatprep.subr.mxu0 0.0
        %1024 = vmatpush1.msra.mxu0 %v991
        %1025 = vmatprep.subr.mxu0 0.0
        %1026 = vmatpush1.msra.mxu0 %v979
        %1027 = vmatprep.subr.mxu0 0.0
        %1028 = vmatpush1.msra.mxu0 %v967
        %1029 = vmatprep.subr.mxu0 0.0
        %1030 = vmatpush1.msra.mxu0 1.0
        %1031 = vmatprep.subr.mxu0 0.0
        %1032 = vmatpush2.msra.mxu0 0.0
        %1033 = vmatprep.subr.mxu0 0.0
        %1034 = vmatpush2.msra.mxu0 0.0
        %1035 = vmatprep.subr.mxu0 0.0
        %1036 = vmatpush2.msra.mxu0 0.0
        %1037 = vmatprep.subr.mxu0 0.0
        %1038 = vmatpush2.msra.mxu0 0.0
        %1039 = vmatprep.subr.mxu0 0.0
        %1040 = vmatpush2.msra.mxu0 0.0
        %1041 = vmatprep.subr.mxu0 0.0
        %1042 = vmatpush2.msra.mxu0 0.0
        %1043 = vmatprep.subr.mxu0 0.0
        %1044 = vmatpush2.msra.mxu0 0.0
        %1045 = vmatprep.subr.mxu0 0.0
        %1046 = vmatpush2.msra.mxu0 0.0
        %1047 = vmatprep.subr.mxu0 0.0
        %1048 = vmatpush2.msra.mxu0 0.0
        %1049 = vmatprep.subr.mxu0 0.0
        %1050 = vmatpush2.msra.mxu0 0.0
        %1051 = vmatprep.subr.mxu0 0.0
        %1052 = vmatpush2.msra.mxu0 0.0
        %1053 = vmatprep.subr.mxu0 0.0
        %1054 = vmatpush2.msra.mxu0 0.0
        %1055 = vmatprep.subr.mxu0 0.0
        %1056 = vmatpush2.msra.mxu0 0.0
        %1057 = vmatprep.subr.mxu0 0.0
        %1058 = vmatpush2.msra.mxu0 0.0
        %1059 = vmatprep.subr.mxu0 0.0
        %1060 = vmatpush2.msra.mxu0 0.0
        %1061 = vmatprep.subr.mxu0 0.0
        %1062 = vmatpush2.msra.mxu0 0.0
        %1063 = vmatprep.mubr.f32.mxu0 0.0
        %1064 = vmatmul.mubr.f32.gmra.mxu0 %v997
        %v1065 = vpop.f32.mrf.mxu0
        %v1066 = vadd.f32 0.0, %v1065
        %v1067 = vpop.f32.mrf.mxu0
        %1068 = vdwg.mxu0
        %1069 = vmatprep.subr.mxu0 0.0
        %1070 = vmatpush1.msra.mxu0 0.0
        %1071 = vmatprep.subr.mxu0 0.0
        %1072 = vmatpush1.msra.mxu0 0.0
        %1073 = vmatprep.subr.mxu0 0.0
        %1074 = vmatpush1.msra.mxu0 0.0
        %1075 = vmatprep.subr.mxu0 0.0
        %1076 = vmatpush1.msra.mxu0 0.0
        %1077 = vmatprep.subr.mxu0 0.0
        %1078 = vmatpush1.msra.mxu0 0.0
        %1079 = vmatprep.subr.mxu0 0.0
        %1080 = vmatpush1.msra.mxu0 0.0
        %1081 = vmatprep.subr.mxu0 0.0
        %1082 = vmatpush1.msra.mxu0 0.0
        %1083 = vmatprep.subr.mxu0 0.0
        %1084 = vmatpush1.msra.mxu0 0.0
        %1085 = vmatprep.subr.mxu0 0.0
        %1086 = vmatpush1.msra.mxu0 0.0
        %1087 = vmatprep.subr.mxu0 0.0
        %1088 = vmatpush1.msra.mxu0 0.0
        %1089 = vmatprep.subr.mxu0 0.0
        %1090 = vmatpush1.msra.mxu0 0.0
        %1091 = vmatprep.subr.mxu0 0.0
        %1092 = vmatpush1.msra.mxu0 0.0
        %1093 = vmatprep.subr.mxu0 0.0
        %1094 = vmatpush1.msra.mxu0 %v992
        %1095 = vmatprep.subr.mxu0 0.0
        %1096 = vmatpush1.msra.mxu0 %v980
        %1097 = vmatprep.subr.mxu0 0.0
        %1098 = vmatpush1.msra.mxu0 %v968
        %1099 = vmatprep.subr.mxu0 0.0
        %1100 = vmatpush1.msra.mxu0 1.0
        %1101 = vmatprep.subr.mxu0 0.0
        %1102 = vmatpush2.msra.mxu0 0.0
        %1103 = vmatprep.subr.mxu0 0.0
        %1104 = vmatpush2.msra.mxu0 0.0
        %1105 = vmatprep.subr.mxu0 0.0
        %1106 = vmatpush2.msra.mxu0 0.0
        %1107 = vmatprep.subr.mxu0 0.0
        %1108 = vmatpush2.msra.mxu0 0.0
        %1109 = vmatprep.subr.mxu0 0.0
        %1110 = vmatpush2.msra.mxu0 0.0
        %1111 = vmatprep.subr.mxu0 0.0
        %1112 = vmatpush2.msra.mxu0 0.0
        %1113 = vmatprep.subr.mxu0 0.0
        %1114 = vmatpush2.msra.mxu0 0.0
        %1115 = vmatprep.subr.mxu0 0.0
        %1116 = vmatpush2.msra.mxu0 0.0
        %1117 = vmatprep.subr.mxu0 0.0
        %1118 = vmatpush2.msra.mxu0 0.0
        %1119 = vmatprep.subr.mxu0 0.0
        %1120 = vmatpush2.msra.mxu0 0.0
        %1121 = vmatprep.subr.mxu0 0.0
        %1122 = vmatpush2.msra.mxu0 0.0
        %1123 = vmatprep.subr.mxu0 0.0
        %1124 = vmatpush2.msra.mxu0 0.0
        %1125 = vmatprep.subr.mxu0 0.0
        %1126 = vmatpush2.msra.mxu0 0.0
        %1127 = vmatprep.subr.mxu0 0.0
        %1128 = vmatpush2.msra.mxu0 0.0
        %1129 = vmatprep.subr.mxu0 0.0
        %1130 = vmatpush2.msra.mxu0 0.0
        %1131 = vmatprep.subr.mxu0 0.0
        %1132 = vmatpush2.msra.mxu0 0.0
        %1133 = vmatprep.mubr.f32.mxu0 0.0
        %1134 = vmatmul.mubr.f32.gmra.mxu0 %v997
        %v1135 = vpop.f32.mrf.mxu0
        %v1136 = vadd.f32 0.0, %v1135
        %v1137 = vpop.f32.mrf.mxu0
        %1138 = vdwg.mxu0
        %1139 = vmatprep.subr.mxu0 0.0
        %1140 = vmatpush1.msra.mxu0 0.0
        %1141 = vmatprep.subr.mxu0 0.0
        %1142 = vmatpush1.msra.mxu0 0.0
        %1143 = vmatprep.subr.mxu0 0.0
        %1144 = vmatpush1.msra.mxu0 0.0
        %1145 = vmatprep.subr.mxu0 0.0
        %1146 = vmatpush1.msra.mxu0 0.0
        %1147 = vmatprep.subr.mxu0 0.0
        %1148 = vmatpush1.msra.mxu0 0.0
        %1149 = vmatprep.subr.mxu0 0.0
        %1150 = vmatpush1.msra.mxu0 0.0
        %1151 = vmatprep.subr.mxu0 0.0
        %1152 = vmatpush1.msra.mxu0 0.0
        %1153 = vmatprep.subr.mxu0 0.0
        %1154 = vmatpush1.msra.mxu0 0.0
        %1155 = vmatprep.subr.mxu0 0.0
        %1156 = vmatpush1.msra.mxu0 0.0
        %1157 = vmatprep.subr.mxu0 0.0
        %1158 = vmatpush1.msra.mxu0 0.0
        %1159 = vmatprep.subr.mxu0 0.0
        %1160 = vmatpush1.msra.mxu0 0.0
        %1161 = vmatprep.subr.mxu0 0.0
        %1162 = vmatpush1.msra.mxu0 0.0
        %1163 = vmatprep.subr.mxu0 0.0
        %1164 = vmatpush1.msra.mxu0 %v993
        %1165 = vmatprep.subr.mxu0 0.0
        %1166 = vmatpush1.msra.mxu0 %v981
        %1167 = vmatprep.subr.mxu0 0.0
        %1168 = vmatpush1.msra.mxu0 %v969
        %1169 = vmatprep.subr.mxu0 0.0
        %1170 = vmatpush1.msra.mxu0 1.0
        %1171 = vmatprep.subr.mxu0 0.0
        %1172 = vmatpush2.msra.mxu0 0.0
        %1173 = vmatprep.subr.mxu0 0.0
        %1174 = vmatpush2.msra.mxu0 0.0
        %1175 = vmatprep.subr.mxu0 0.0
        %1176 = vmatpush2.msra.mxu0 0.0
        %1177 = vmatprep.subr.mxu0 0.0
        %1178 = vmatpush2.msra.mxu0 0.0
        %1179 = vmatprep.subr.mxu0 0.0
        %1180 = vmatpush2.msra.mxu0 0.0
        %1181 = vmatprep.subr.mxu0 0.0
        %1182 = vmatpush2.msra.mxu0 0.0
        %1183 = vmatprep.subr.mxu0 0.0
        %1184 = vmatpush2.msra.mxu0 0.0
        %1185 = vmatprep.subr.mxu0 0.0
        %1186 = vmatpush2.msra.mxu0 0.0
        %1187 = vmatprep.subr.mxu0 0.0
        %1188 = vmatpush2.msra.mxu0 0.0
        %1189 = vmatprep.subr.mxu0 0.0
        %1190 = vmatpush2.msra.mxu0 0.0
        %1191 = vmatprep.subr.mxu0 0.0
        %1192 = vmatpush2.msra.mxu0 0.0
        %1193 = vmatprep.subr.mxu0 0.0
        %1194 = vmatpush2.msra.mxu0 0.0
        %1195 = vmatprep.subr.mxu0 0.0
        %1196 = vmatpush2.msra.mxu0 0.0
        %1197 = vmatprep.subr.mxu0 0.0
        %1198 = vmatpush2.msra.mxu0 0.0
        %1199 = vmatprep.subr.mxu0 0.0
        %1200 = vmatpush2.msra.mxu0 0.0
        %1201 = vmatprep.subr.mxu0 0.0
        %1202 = vmatpush2.msra.mxu0 0.0
        %1203 = vmatprep.mubr.f32.mxu0 0.0
        %1204 = vmatmul.mubr.f32.gmra.mxu0 %v997
        %v1205 = vpop.f32.mrf.mxu0
        %v1206 = vadd.f32 0.0, %v1205
        %v1207 = vpop.f32.mrf.mxu0
        %1208 = vdwg.mxu0
        %v1209 = vadd.f32 %v783, %v1066
        %v1210 = vadd.f32 %v784, %v1136
        %v1211 = vadd.f32 %v785, %v1206
        %v1212 = vtanh.pop %v1209
        %v1213 = vtanh.pop %v1210
        %v1214 = vtanh.pop %v1211
        %v1215 = vmul.f32 %v1212, 0.2857143
        %v1216 = vmul.f32 %v1213, 0.2857143
        %v1217 = vmul.f32 %v1214, 0.2857143
        %v1218 = vsub.f32 1.0, %v1215
        %v1219 = vsub.f32 1.0, %v1216
        %v1220 = vsub.f32 1.0, %v1217
        %v1221 = vsub.f32 3.5, %v1212
        %v1222 = vsub.f32 3.5, %v1213
        %v1223 = vsub.f32 3.5, %v1214
        %v1224 = vmul.f32 %v1221, %v1218
        %v1225 = vmul.f32 %v1222, %v1219
        %v1226 = vmul.f32 %v1223, %v1220
        %v1227 = vsub.f32 %v1224, 1.1
        %v1228 = vsub.f32 %v1225, 1.1
        %v1229 = vsub.f32 %v1226, 1.1
        %v1230 = vmul.f32 %v1227, 0.41666666
        %v1231 = vmul.f32 %v1228, 0.41666666
        %v1232 = vmul.f32 %v1229, 0.41666666
        %v1233 = vmul.f32 %v1221, %v1230
        %v1234 = vmul.f32 %v1222, %v1231
        %v1235 = vmul.f32 %v1223, %v1232
        %v1236 = vmul.f32 %v1218, 1.7142857
        %v1237 = vmul.f32 %v1219, 1.7142857
        %v1238 = vmul.f32 %v1220, 1.7142857
        %v1239 = vsub.f32 %v1233, %v1236
        %v1240 = vsub.f32 %v1234, %v1237
        %v1241 = vsub.f32 %v1235, %v1238
        %v1242 = vmul.f32 %v1239, 0.56
        %v1243 = vmul.f32 %v1240, 0.56
        %v1244 = vmul.f32 %v1241, 0.56
        %1248 = vrot.lane.b32.xlu0 %v1218, 32
        %v1249 = vpop.permute.xlu0 %1248
        %1250 = vrot.lane.b32.xlu0 %v1219, 32
        %v1251 = vpop.permute.xlu0 %1250
        %1252 = vrot.lane.b32.xlu0 %v1220, 32
        %v1253 = vpop.permute.xlu0 %1252
        %1260 = vrot.lane.b32.xlu0 %v1230, 64
        %v1261 = vpop.permute.xlu0 %1260
        %1262 = vrot.lane.b32.xlu0 %v1231, 64
        %v1263 = vpop.permute.xlu0 %1262
        %1264 = vrot.lane.b32.xlu0 %v1232, 64
        %v1265 = vpop.permute.xlu0 %1264
        %1272 = vrot.lane.b32.xlu0 %v1242, 96
        %v1273 = vpop.permute.xlu0 %1272
        %1274 = vrot.lane.b32.xlu0 %v1243, 96
        %v1275 = vpop.permute.xlu0 %1274
        %1276 = vrot.lane.b32.xlu0 %v1244, 96
        %v1277 = vpop.permute.xlu0 %1276
        %v1281 = vsel %vm428, 1.0, %v1249
        %v1282 = vsel %vm428, 1.0, %v1251
        %v1283 = vsel %vm428, 1.0, %v1253
        %v1284 = vsel %vm432, %v1281, %v1261
        %v1285 = vsel %vm432, %v1282, %v1263
        %v1286 = vsel %vm432, %v1283, %v1265
        %v1287 = vsel %vm436, %v1284, %v1273
        %v1288 = vsel %vm436, %v1285, %v1275
        %v1289 = vsel %vm436, %v1286, %v1277
        %s1290 = scalar_lea.vmem %s4, 256
        %v1291 = vld [vmem:[%s1290] sm:$0xff]
        %v1292 = vld [vmem:[%s1290 + $0x8] sm:$0xff]
        %v1293 = vld [vmem:[%s1290 + $0x10] sm:$0xff]
        %v1294 = vld [vmem:[%s1290 + $0x18] sm:$0xff]
        %v1295 = vld [vmem:[%s1290 + $0x20] sm:$0xff]
        %v1296 = vld [vmem:[%s1290 + $0x28] sm:$0xff]
        %v1297 = vld [vmem:[%s1290 + $0x30] sm:$0xff]
        %v1298 = vld [vmem:[%s1290 + $0x38] sm:$0xff]
        %v1299 = vld [vmem:[%s1290 + $0x40] sm:$0xff]
        %v1300 = vld [vmem:[%s1290 + $0x48] sm:$0xff]
        %v1301 = vld [vmem:[%s1290 + $0x50] sm:$0xff]
        %v1302 = vld [vmem:[%s1290 + $0x58] sm:$0xff]
        %v1303 = vld [vmem:[%s1290 + $0x60] sm:$0xff]
        %v1304 = vld [vmem:[%s1290 + $0x68] sm:$0xff]
        %v1305 = vld [vmem:[%s1290 + $0x70] sm:$0xff]
        %v1306 = vld [vmem:[%s1290 + $0x78] sm:$0xff]
        %1307 = vmatprep.subr.mxu0 0.0
        %1308 = vmatpush1.msra.mxu0 %v1306
        %1309 = vmatprep.subr.mxu0 0.0
        %1310 = vmatpush1.msra.mxu0 %v1305
        %1311 = vmatprep.subr.mxu0 0.0
        %1312 = vmatpush1.msra.mxu0 %v1304
        %1313 = vmatprep.subr.mxu0 0.0
        %1314 = vmatpush1.msra.mxu0 %v1303
        %1315 = vmatprep.subr.mxu0 0.0
        %1316 = vmatpush1.msra.mxu0 %v1302
        %1317 = vmatprep.subr.mxu0 0.0
        %1318 = vmatpush1.msra.mxu0 %v1301
        %1319 = vmatprep.subr.mxu0 0.0
        %1320 = vmatpush1.msra.mxu0 %v1300
        %1321 = vmatprep.subr.mxu0 0.0
        %1322 = vmatpush1.msra.mxu0 %v1299
        %1323 = vmatprep.subr.mxu0 0.0
        %1324 = vmatpush1.msra.mxu0 %v1298
        %1325 = vmatprep.subr.mxu0 0.0
        %1326 = vmatpush1.msra.mxu0 %v1297
        %1327 = vmatprep.subr.mxu0 0.0
        %1328 = vmatpush1.msra.mxu0 %v1296
        %1329 = vmatprep.subr.mxu0 0.0
        %1330 = vmatpush1.msra.mxu0 %v1295
        %1331 = vmatprep.subr.mxu0 0.0
        %1332 = vmatpush1.msra.mxu0 %v1294
        %1333 = vmatprep.subr.mxu0 0.0
        %1334 = vmatpush1.msra.mxu0 %v1293
        %1335 = vmatprep.subr.mxu0 0.0
        %1336 = vmatpush1.msra.mxu0 %v1292
        %1337 = vmatprep.subr.mxu0 0.0
        %1338 = vmatpush1.msra.mxu0 %v1291
        %1339 = vmatprep.subr.mxu0 0.0
        %1340 = vmatpush2.msra.mxu0 0.0
        %1341 = vmatprep.subr.mxu0 0.0
        %1342 = vmatpush2.msra.mxu0 0.0
        %1343 = vmatprep.subr.mxu0 0.0
        %1344 = vmatpush2.msra.mxu0 0.0
        %1345 = vmatprep.subr.mxu0 0.0
        %1346 = vmatpush2.msra.mxu0 0.0
        %1347 = vmatprep.subr.mxu0 0.0
        %1348 = vmatpush2.msra.mxu0 0.0
        %1349 = vmatprep.subr.mxu0 0.0
        %1350 = vmatpush2.msra.mxu0 0.0
        %1351 = vmatprep.subr.mxu0 0.0
        %1352 = vmatpush2.msra.mxu0 0.0
        %1353 = vmatprep.subr.mxu0 0.0
        %1354 = vmatpush2.msra.mxu0 0.0
        %1355 = vmatprep.subr.mxu0 0.0
        %1356 = vmatpush2.msra.mxu0 0.0
        %1357 = vmatprep.subr.mxu0 0.0
        %1358 = vmatpush2.msra.mxu0 0.0
        %1359 = vmatprep.subr.mxu0 0.0
        %1360 = vmatpush2.msra.mxu0 0.0
        %1361 = vmatprep.subr.mxu0 0.0
        %1362 = vmatpush2.msra.mxu0 0.0
        %1363 = vmatprep.subr.mxu0 0.0
        %1364 = vmatpush2.msra.mxu0 0.0
        %1365 = vmatprep.subr.mxu0 0.0
        %1366 = vmatpush2.msra.mxu0 0.0
        %1367 = vmatprep.subr.mxu0 0.0
        %1368 = vmatpush2.msra.mxu0 0.0
        %1369 = vmatprep.subr.mxu0 0.0
        %1370 = vmatpush2.msra.mxu0 0.0
        %1371 = vmatprep.mubr.f32.mxu0 0.0
        %1372 = vmatmul.mubr.f32.gmra.mxu0 %v1287
        %v1373 = vpop.f32.mrf.mxu0
        %v1374 = vadd.f32 0.0, %v1373
        %v1375 = vpop.f32.mrf.mxu0
        %1376 = vmatprep.mubr.f32.mxu0 0.0
        %1377 = vmatmul.mubr.f32.gmra.mxu0 %v1288
        %v1378 = vpop.f32.mrf.mxu0
        %v1379 = vadd.f32 0.0, %v1378
        %v1380 = vpop.f32.mrf.mxu0
        %1381 = vmatprep.mubr.f32.mxu0 0.0
        %1382 = vmatmul.mubr.f32.gmra.mxu0 %v1289
        %v1383 = vpop.f32.mrf.mxu0
        %v1384 = vadd.f32 0.0, %v1383
        %v1385 = vpop.f32.mrf.mxu0
        %1386 = vdwg.mxu0
        %v1387 = vtanh.pop %v1374
        %v1388 = vtanh.pop %v1379
        %v1389 = vtanh.pop %v1384
        %v1390 = vmul.f32 %v1387, 0.2857143
        %v1391 = vmul.f32 %v1388, 0.2857143
        %v1392 = vmul.f32 %v1389, 0.2857143
        %v1393 = vsub.f32 1.0, %v1390
        %v1394 = vsub.f32 1.0, %v1391
        %v1395 = vsub.f32 1.0, %v1392
        %v1396 = vsub.f32 3.5, %v1387
        %v1397 = vsub.f32 3.5, %v1388
        %v1398 = vsub.f32 3.5, %v1389
        %v1399 = vmul.f32 %v1396, %v1393
        %v1400 = vmul.f32 %v1397, %v1394
        %v1401 = vmul.f32 %v1398, %v1395
        %v1402 = vsub.f32 %v1399, 1.1
        %v1403 = vsub.f32 %v1400, 1.1
        %v1404 = vsub.f32 %v1401, 1.1
        %v1405 = vmul.f32 %v1402, 0.41666666
        %v1406 = vmul.f32 %v1403, 0.41666666
        %v1407 = vmul.f32 %v1404, 0.41666666
        %v1408 = vmul.f32 %v1396, %v1405
        %v1409 = vmul.f32 %v1397, %v1406
        %v1410 = vmul.f32 %v1398, %v1407
        %v1411 = vmul.f32 %v1393, 1.7142857
        %v1412 = vmul.f32 %v1394, 1.7142857
        %v1413 = vmul.f32 %v1395, 1.7142857
        %v1414 = vsub.f32 %v1408, %v1411
        %v1415 = vsub.f32 %v1409, %v1412
        %v1416 = vsub.f32 %v1410, %v1413
        %v1417 = vmul.f32 %v1414, 0.56
        %v1418 = vmul.f32 %v1415, 0.56
        %v1419 = vmul.f32 %v1416, 0.56
        %s1420 = scalar_lea.vmem %s5, 16
        %v1421 = vld [vmem:[%s1420] sm:$0xff]
        %v1423 = vsel %vm428, %v1421, 0
        %1425 = vmatprep.subr.mxu0 0.0
        %1426 = vmatpush1.msra.mxu0 0.0
        %1427 = vmatprep.subr.mxu0 0.0
        %1428 = vmatpush1.msra.mxu0 0.0
        %1429 = vmatprep.subr.mxu0 0.0
        %1430 = vmatpush1.msra.mxu0 0.0
        %1431 = vmatprep.subr.mxu0 0.0
        %1432 = vmatpush1.msra.mxu0 0.0
        %1433 = vmatprep.subr.mxu0 0.0
        %1434 = vmatpush1.msra.mxu0 0.0
        %1435 = vmatprep.subr.mxu0 0.0
        %1436 = vmatpush1.msra.mxu0 0.0
        %1437 = vmatprep.subr.mxu0 0.0
        %1438 = vmatpush1.msra.mxu0 0.0
        %1439 = vmatprep.subr.mxu0 0.0
        %1440 = vmatpush1.msra.mxu0 0.0
        %1441 = vmatprep.subr.mxu0 0.0
        %1442 = vmatpush1.msra.mxu0 0.0
        %1443 = vmatprep.subr.mxu0 0.0
        %1444 = vmatpush1.msra.mxu0 0.0
        %1445 = vmatprep.subr.mxu0 0.0
        %1446 = vmatpush1.msra.mxu0 0.0
        %1447 = vmatprep.subr.mxu0 0.0
        %1448 = vmatpush1.msra.mxu0 0.0
        %1449 = vmatprep.subr.mxu0 0.0
        %1450 = vmatpush1.msra.mxu0 %v1417
        %1451 = vmatprep.subr.mxu0 0.0
        %1452 = vmatpush1.msra.mxu0 %v1405
        %1453 = vmatprep.subr.mxu0 0.0
        %1454 = vmatpush1.msra.mxu0 %v1393
        %1455 = vmatprep.subr.mxu0 0.0
        %1456 = vmatpush1.msra.mxu0 1.0
        %1457 = vmatprep.subr.mxu0 0.0
        %1458 = vmatpush2.msra.mxu0 0.0
        %1459 = vmatprep.subr.mxu0 0.0
        %1460 = vmatpush2.msra.mxu0 0.0
        %1461 = vmatprep.subr.mxu0 0.0
        %1462 = vmatpush2.msra.mxu0 0.0
        %1463 = vmatprep.subr.mxu0 0.0
        %1464 = vmatpush2.msra.mxu0 0.0
        %1465 = vmatprep.subr.mxu0 0.0
        %1466 = vmatpush2.msra.mxu0 0.0
        %1467 = vmatprep.subr.mxu0 0.0
        %1468 = vmatpush2.msra.mxu0 0.0
        %1469 = vmatprep.subr.mxu0 0.0
        %1470 = vmatpush2.msra.mxu0 0.0
        %1471 = vmatprep.subr.mxu0 0.0
        %1472 = vmatpush2.msra.mxu0 0.0
        %1473 = vmatprep.subr.mxu0 0.0
        %1474 = vmatpush2.msra.mxu0 0.0
        %1475 = vmatprep.subr.mxu0 0.0
        %1476 = vmatpush2.msra.mxu0 0.0
        %1477 = vmatprep.subr.mxu0 0.0
        %1478 = vmatpush2.msra.mxu0 0.0
        %1479 = vmatprep.subr.mxu0 0.0
        %1480 = vmatpush2.msra.mxu0 0.0
        %1481 = vmatprep.subr.mxu0 0.0
        %1482 = vmatpush2.msra.mxu0 0.0
        %1483 = vmatprep.subr.mxu0 0.0
        %1484 = vmatpush2.msra.mxu0 0.0
        %1485 = vmatprep.subr.mxu0 0.0
        %1486 = vmatpush2.msra.mxu0 0.0
        %1487 = vmatprep.subr.mxu0 0.0
        %1488 = vmatpush2.msra.mxu0 0.0
        %1489 = vmatprep.mubr.f32.mxu0 0.0
        %1490 = vmatmul.mubr.f32.gmra.mxu0 %v1423
        %v1491 = vpop.f32.mrf.mxu0
        %v1492 = vadd.f32 0.0, %v1491
        %v1493 = vpop.f32.mrf.mxu0
        %1494 = vdwg.mxu0
        %1495 = vmatprep.subr.mxu0 0.0
        %1496 = vmatpush1.msra.mxu0 0.0
        %1497 = vmatprep.subr.mxu0 0.0
        %1498 = vmatpush1.msra.mxu0 0.0
        %1499 = vmatprep.subr.mxu0 0.0
        %1500 = vmatpush1.msra.mxu0 0.0
        %1501 = vmatprep.subr.mxu0 0.0
        %1502 = vmatpush1.msra.mxu0 0.0
        %1503 = vmatprep.subr.mxu0 0.0
        %1504 = vmatpush1.msra.mxu0 0.0
        %1505 = vmatprep.subr.mxu0 0.0
        %1506 = vmatpush1.msra.mxu0 0.0
        %1507 = vmatprep.subr.mxu0 0.0
        %1508 = vmatpush1.msra.mxu0 0.0
        %1509 = vmatprep.subr.mxu0 0.0
        %1510 = vmatpush1.msra.mxu0 0.0
        %1511 = vmatprep.subr.mxu0 0.0
        %1512 = vmatpush1.msra.mxu0 0.0
        %1513 = vmatprep.subr.mxu0 0.0
        %1514 = vmatpush1.msra.mxu0 0.0
        %1515 = vmatprep.subr.mxu0 0.0
        %1516 = vmatpush1.msra.mxu0 0.0
        %1517 = vmatprep.subr.mxu0 0.0
        %1518 = vmatpush1.msra.mxu0 0.0
        %1519 = vmatprep.subr.mxu0 0.0
        %1520 = vmatpush1.msra.mxu0 %v1418
        %1521 = vmatprep.subr.mxu0 0.0
        %1522 = vmatpush1.msra.mxu0 %v1406
        %1523 = vmatprep.subr.mxu0 0.0
        %1524 = vmatpush1.msra.mxu0 %v1394
        %1525 = vmatprep.subr.mxu0 0.0
        %1526 = vmatpush1.msra.mxu0 1.0
        %1527 = vmatprep.subr.mxu0 0.0
        %1528 = vmatpush2.msra.mxu0 0.0
        %1529 = vmatprep.subr.mxu0 0.0
        %1530 = vmatpush2.msra.mxu0 0.0
        %1531 = vmatprep.subr.mxu0 0.0
        %1532 = vmatpush2.msra.mxu0 0.0
        %1533 = vmatprep.subr.mxu0 0.0
        %1534 = vmatpush2.msra.mxu0 0.0
        %1535 = vmatprep.subr.mxu0 0.0
        %1536 = vmatpush2.msra.mxu0 0.0
        %1537 = vmatprep.subr.mxu0 0.0
        %1538 = vmatpush2.msra.mxu0 0.0
        %1539 = vmatprep.subr.mxu0 0.0
        %1540 = vmatpush2.msra.mxu0 0.0
        %1541 = vmatprep.subr.mxu0 0.0
        %1542 = vmatpush2.msra.mxu0 0.0
        %1543 = vmatprep.subr.mxu0 0.0
        %1544 = vmatpush2.msra.mxu0 0.0
        %1545 = vmatprep.subr.mxu0 0.0
        %1546 = vmatpush2.msra.mxu0 0.0
        %1547 = vmatprep.subr.mxu0 0.0
        %1548 = vmatpush2.msra.mxu0 0.0
        %1549 = vmatprep.subr.mxu0 0.0
        %1550 = vmatpush2.msra.mxu0 0.0
        %1551 = vmatprep.subr.mxu0 0.0
        %1552 = vmatpush2.msra.mxu0 0.0
        %1553 = vmatprep.subr.mxu0 0.0
        %1554 = vmatpush2.msra.mxu0 0.0
        %1555 = vmatprep.subr.mxu0 0.0
        %1556 = vmatpush2.msra.mxu0 0.0
        %1557 = vmatprep.subr.mxu0 0.0
        %1558 = vmatpush2.msra.mxu0 0.0
        %1559 = vmatprep.mubr.f32.mxu0 0.0
        %1560 = vmatmul.mubr.f32.gmra.mxu0 %v1423
        %v1561 = vpop.f32.mrf.mxu0
        %v1562 = vadd.f32 0.0, %v1561
        %v1563 = vpop.f32.mrf.mxu0
        %1564 = vdwg.mxu0
        %1565 = vmatprep.subr.mxu0 0.0
        %1566 = vmatpush1.msra.mxu0 0.0
        %1567 = vmatprep.subr.mxu0 0.0
        %1568 = vmatpush1.msra.mxu0 0.0
        %1569 = vmatprep.subr.mxu0 0.0
        %1570 = vmatpush1.msra.mxu0 0.0
        %1571 = vmatprep.subr.mxu0 0.0
        %1572 = vmatpush1.msra.mxu0 0.0
        %1573 = vmatprep.subr.mxu0 0.0
        %1574 = vmatpush1.msra.mxu0 0.0
        %1575 = vmatprep.subr.mxu0 0.0
        %1576 = vmatpush1.msra.mxu0 0.0
        %1577 = vmatprep.subr.mxu0 0.0
        %1578 = vmatpush1.msra.mxu0 0.0
        %1579 = vmatprep.subr.mxu0 0.0
        %1580 = vmatpush1.msra.mxu0 0.0
        %1581 = vmatprep.subr.mxu0 0.0
        %1582 = vmatpush1.msra.mxu0 0.0
        %1583 = vmatprep.subr.mxu0 0.0
        %1584 = vmatpush1.msra.mxu0 0.0
        %1585 = vmatprep.subr.mxu0 0.0
        %1586 = vmatpush1.msra.mxu0 0.0
        %1587 = vmatprep.subr.mxu0 0.0
        %1588 = vmatpush1.msra.mxu0 0.0
        %1589 = vmatprep.subr.mxu0 0.0
        %1590 = vmatpush1.msra.mxu0 %v1419
        %1591 = vmatprep.subr.mxu0 0.0
        %1592 = vmatpush1.msra.mxu0 %v1407
        %1593 = vmatprep.subr.mxu0 0.0
        %1594 = vmatpush1.msra.mxu0 %v1395
        %1595 = vmatprep.subr.mxu0 0.0
        %1596 = vmatpush1.msra.mxu0 1.0
        %1597 = vmatprep.subr.mxu0 0.0
        %1598 = vmatpush2.msra.mxu0 0.0
        %1599 = vmatprep.subr.mxu0 0.0
        %1600 = vmatpush2.msra.mxu0 0.0
        %1601 = vmatprep.subr.mxu0 0.0
        %1602 = vmatpush2.msra.mxu0 0.0
        %1603 = vmatprep.subr.mxu0 0.0
        %1604 = vmatpush2.msra.mxu0 0.0
        %1605 = vmatprep.subr.mxu0 0.0
        %1606 = vmatpush2.msra.mxu0 0.0
        %1607 = vmatprep.subr.mxu0 0.0
        %1608 = vmatpush2.msra.mxu0 0.0
        %1609 = vmatprep.subr.mxu0 0.0
        %1610 = vmatpush2.msra.mxu0 0.0
        %1611 = vmatprep.subr.mxu0 0.0
        %1612 = vmatpush2.msra.mxu0 0.0
        %1613 = vmatprep.subr.mxu0 0.0
        %1614 = vmatpush2.msra.mxu0 0.0
        %1615 = vmatprep.subr.mxu0 0.0
        %1616 = vmatpush2.msra.mxu0 0.0
        %1617 = vmatprep.subr.mxu0 0.0
        %1618 = vmatpush2.msra.mxu0 0.0
        %1619 = vmatprep.subr.mxu0 0.0
        %1620 = vmatpush2.msra.mxu0 0.0
        %1621 = vmatprep.subr.mxu0 0.0
        %1622 = vmatpush2.msra.mxu0 0.0
        %1623 = vmatprep.subr.mxu0 0.0
        %1624 = vmatpush2.msra.mxu0 0.0
        %1625 = vmatprep.subr.mxu0 0.0
        %1626 = vmatpush2.msra.mxu0 0.0
        %1627 = vmatprep.subr.mxu0 0.0
        %1628 = vmatpush2.msra.mxu0 0.0
        %1629 = vmatprep.mubr.f32.mxu0 0.0
        %1630 = vmatmul.mubr.f32.gmra.mxu0 %v1423
        %v1631 = vpop.f32.mrf.mxu0
        %v1632 = vadd.f32 0.0, %v1631
        %v1633 = vpop.f32.mrf.mxu0
        %1634 = vdwg.mxu0
        %v1635 = vadd.f32 %v1209, %v1492
        %v1636 = vadd.f32 %v1210, %v1562
        %v1637 = vadd.f32 %v1211, %v1632
        %v1638 = vtanh.pop %v1635
        %v1639 = vtanh.pop %v1636
        %v1640 = vtanh.pop %v1637
        %v1641 = vmul.f32 %v1638, 0.2857143
        %v1642 = vmul.f32 %v1639, 0.2857143
        %v1643 = vmul.f32 %v1640, 0.2857143
        %v1644 = vsub.f32 1.0, %v1641
        %v1645 = vsub.f32 1.0, %v1642
        %v1646 = vsub.f32 1.0, %v1643
        %v1647 = vsub.f32 3.5, %v1638
        %v1648 = vsub.f32 3.5, %v1639
        %v1649 = vsub.f32 3.5, %v1640
        %v1650 = vmul.f32 %v1647, %v1644
        %v1651 = vmul.f32 %v1648, %v1645
        %v1652 = vmul.f32 %v1649, %v1646
        %v1653 = vsub.f32 %v1650, 1.1
        %v1654 = vsub.f32 %v1651, 1.1
        %v1655 = vsub.f32 %v1652, 1.1
        %v1656 = vmul.f32 %v1653, 0.41666666
        %v1657 = vmul.f32 %v1654, 0.41666666
        %v1658 = vmul.f32 %v1655, 0.41666666
        %v1659 = vmul.f32 %v1647, %v1656
        %v1660 = vmul.f32 %v1648, %v1657
        %v1661 = vmul.f32 %v1649, %v1658
        %v1662 = vmul.f32 %v1644, 1.7142857
        %v1663 = vmul.f32 %v1645, 1.7142857
        %v1664 = vmul.f32 %v1646, 1.7142857
        %v1665 = vsub.f32 %v1659, %v1662
        %v1666 = vsub.f32 %v1660, %v1663
        %v1667 = vsub.f32 %v1661, %v1664
        %v1668 = vmul.f32 %v1665, 0.56
        %v1669 = vmul.f32 %v1666, 0.56
        %v1670 = vmul.f32 %v1667, 0.56
        %1674 = vrot.lane.b32.xlu0 %v1644, 32
        %v1675 = vpop.permute.xlu0 %1674
        %1676 = vrot.lane.b32.xlu0 %v1645, 32
        %v1677 = vpop.permute.xlu0 %1676
        %1678 = vrot.lane.b32.xlu0 %v1646, 32
        %v1679 = vpop.permute.xlu0 %1678
        %1686 = vrot.lane.b32.xlu0 %v1656, 64
        %v1687 = vpop.permute.xlu0 %1686
        %1688 = vrot.lane.b32.xlu0 %v1657, 64
        %v1689 = vpop.permute.xlu0 %1688
        %1690 = vrot.lane.b32.xlu0 %v1658, 64
        %v1691 = vpop.permute.xlu0 %1690
        %1698 = vrot.lane.b32.xlu0 %v1668, 96
        %v1699 = vpop.permute.xlu0 %1698
        %1700 = vrot.lane.b32.xlu0 %v1669, 96
        %v1701 = vpop.permute.xlu0 %1700
        %1702 = vrot.lane.b32.xlu0 %v1670, 96
        %v1703 = vpop.permute.xlu0 %1702
        %v1707 = vsel %vm428, 1.0, %v1675
        %v1708 = vsel %vm428, 1.0, %v1677
        %v1709 = vsel %vm428, 1.0, %v1679
        %v1710 = vsel %vm432, %v1707, %v1687
        %v1711 = vsel %vm432, %v1708, %v1689
        %v1712 = vsel %vm432, %v1709, %v1691
        %v1713 = vsel %vm436, %v1710, %v1699
        %v1714 = vsel %vm436, %v1711, %v1701
        %v1715 = vsel %vm436, %v1712, %v1703
        %s1716 = scalar_lea.vmem %s4, 384
        %v1717 = vld [vmem:[%s1716] sm:$0xff]
        %v1718 = vld [vmem:[%s1716 + $0x8] sm:$0xff]
        %v1719 = vld [vmem:[%s1716 + $0x10] sm:$0xff]
        %v1720 = vld [vmem:[%s1716 + $0x18] sm:$0xff]
        %v1721 = vld [vmem:[%s1716 + $0x20] sm:$0xff]
        %v1722 = vld [vmem:[%s1716 + $0x28] sm:$0xff]
        %v1723 = vld [vmem:[%s1716 + $0x30] sm:$0xff]
        %v1724 = vld [vmem:[%s1716 + $0x38] sm:$0xff]
        %v1725 = vld [vmem:[%s1716 + $0x40] sm:$0xff]
        %v1726 = vld [vmem:[%s1716 + $0x48] sm:$0xff]
        %v1727 = vld [vmem:[%s1716 + $0x50] sm:$0xff]
        %v1728 = vld [vmem:[%s1716 + $0x58] sm:$0xff]
        %v1729 = vld [vmem:[%s1716 + $0x60] sm:$0xff]
        %v1730 = vld [vmem:[%s1716 + $0x68] sm:$0xff]
        %v1731 = vld [vmem:[%s1716 + $0x70] sm:$0xff]
        %v1732 = vld [vmem:[%s1716 + $0x78] sm:$0xff]
        %1733 = vmatprep.subr.mxu0 0.0
        %1734 = vmatpush1.msra.mxu0 %v1732
        %1735 = vmatprep.subr.mxu0 0.0
        %1736 = vmatpush1.msra.mxu0 %v1731
        %1737 = vmatprep.subr.mxu0 0.0
        %1738 = vmatpush1.msra.mxu0 %v1730
        %1739 = vmatprep.subr.mxu0 0.0
        %1740 = vmatpush1.msra.mxu0 %v1729
        %1741 = vmatprep.subr.mxu0 0.0
        %1742 = vmatpush1.msra.mxu0 %v1728
        %1743 = vmatprep.subr.mxu0 0.0
        %1744 = vmatpush1.msra.mxu0 %v1727
        %1745 = vmatprep.subr.mxu0 0.0
        %1746 = vmatpush1.msra.mxu0 %v1726
        %1747 = vmatprep.subr.mxu0 0.0
        %1748 = vmatpush1.msra.mxu0 %v1725
        %1749 = vmatprep.subr.mxu0 0.0
        %1750 = vmatpush1.msra.mxu0 %v1724
        %1751 = vmatprep.subr.mxu0 0.0
        %1752 = vmatpush1.msra.mxu0 %v1723
        %1753 = vmatprep.subr.mxu0 0.0
        %1754 = vmatpush1.msra.mxu0 %v1722
        %1755 = vmatprep.subr.mxu0 0.0
        %1756 = vmatpush1.msra.mxu0 %v1721
        %1757 = vmatprep.subr.mxu0 0.0
        %1758 = vmatpush1.msra.mxu0 %v1720
        %1759 = vmatprep.subr.mxu0 0.0
        %1760 = vmatpush1.msra.mxu0 %v1719
        %1761 = vmatprep.subr.mxu0 0.0
        %1762 = vmatpush1.msra.mxu0 %v1718
        %1763 = vmatprep.subr.mxu0 0.0
        %1764 = vmatpush1.msra.mxu0 %v1717
        %1765 = vmatprep.subr.mxu0 0.0
        %1766 = vmatpush2.msra.mxu0 0.0
        %1767 = vmatprep.subr.mxu0 0.0
        %1768 = vmatpush2.msra.mxu0 0.0
        %1769 = vmatprep.subr.mxu0 0.0
        %1770 = vmatpush2.msra.mxu0 0.0
        %1771 = vmatprep.subr.mxu0 0.0
        %1772 = vmatpush2.msra.mxu0 0.0
        %1773 = vmatprep.subr.mxu0 0.0
        %1774 = vmatpush2.msra.mxu0 0.0
        %1775 = vmatprep.subr.mxu0 0.0
        %1776 = vmatpush2.msra.mxu0 0.0
        %1777 = vmatprep.subr.mxu0 0.0
        %1778 = vmatpush2.msra.mxu0 0.0
        %1779 = vmatprep.subr.mxu0 0.0
        %1780 = vmatpush2.msra.mxu0 0.0
        %1781 = vmatprep.subr.mxu0 0.0
        %1782 = vmatpush2.msra.mxu0 0.0
        %1783 = vmatprep.subr.mxu0 0.0
        %1784 = vmatpush2.msra.mxu0 0.0
        %1785 = vmatprep.subr.mxu0 0.0
        %1786 = vmatpush2.msra.mxu0 0.0
        %1787 = vmatprep.subr.mxu0 0.0
        %1788 = vmatpush2.msra.mxu0 0.0
        %1789 = vmatprep.subr.mxu0 0.0
        %1790 = vmatpush2.msra.mxu0 0.0
        %1791 = vmatprep.subr.mxu0 0.0
        %1792 = vmatpush2.msra.mxu0 0.0
        %1793 = vmatprep.subr.mxu0 0.0
        %1794 = vmatpush2.msra.mxu0 0.0
        %1795 = vmatprep.subr.mxu0 0.0
        %1796 = vmatpush2.msra.mxu0 0.0
        %1797 = vmatprep.mubr.f32.mxu0 0.0
        %1798 = vmatmul.mubr.f32.gmra.mxu0 %v1713
        %v1799 = vpop.f32.mrf.mxu0
        %v1800 = vadd.f32 0.0, %v1799
        %v1801 = vpop.f32.mrf.mxu0
        %1802 = vmatprep.mubr.f32.mxu0 0.0
        %1803 = vmatmul.mubr.f32.gmra.mxu0 %v1714
        %v1804 = vpop.f32.mrf.mxu0
        %v1805 = vadd.f32 0.0, %v1804
        %v1806 = vpop.f32.mrf.mxu0
        %1807 = vmatprep.mubr.f32.mxu0 0.0
        %1808 = vmatmul.mubr.f32.gmra.mxu0 %v1715
        %v1809 = vpop.f32.mrf.mxu0
        %v1810 = vadd.f32 0.0, %v1809
        %v1811 = vpop.f32.mrf.mxu0
        %1812 = vdwg.mxu0
        %v1813 = vtanh.pop %v1800
        %v1814 = vtanh.pop %v1805
        %v1815 = vtanh.pop %v1810
        %v1816 = vmul.f32 %v1813, 0.2857143
        %v1817 = vmul.f32 %v1814, 0.2857143
        %v1818 = vmul.f32 %v1815, 0.2857143
        %v1819 = vsub.f32 1.0, %v1816
        %v1820 = vsub.f32 1.0, %v1817
        %v1821 = vsub.f32 1.0, %v1818
        %v1822 = vsub.f32 3.5, %v1813
        %v1823 = vsub.f32 3.5, %v1814
        %v1824 = vsub.f32 3.5, %v1815
        %v1825 = vmul.f32 %v1822, %v1819
        %v1826 = vmul.f32 %v1823, %v1820
        %v1827 = vmul.f32 %v1824, %v1821
        %v1828 = vsub.f32 %v1825, 1.1
        %v1829 = vsub.f32 %v1826, 1.1
        %v1830 = vsub.f32 %v1827, 1.1
        %v1831 = vmul.f32 %v1828, 0.41666666
        %v1832 = vmul.f32 %v1829, 0.41666666
        %v1833 = vmul.f32 %v1830, 0.41666666
        %v1834 = vmul.f32 %v1822, %v1831
        %v1835 = vmul.f32 %v1823, %v1832
        %v1836 = vmul.f32 %v1824, %v1833
        %v1837 = vmul.f32 %v1819, 1.7142857
        %v1838 = vmul.f32 %v1820, 1.7142857
        %v1839 = vmul.f32 %v1821, 1.7142857
        %v1840 = vsub.f32 %v1834, %v1837
        %v1841 = vsub.f32 %v1835, %v1838
        %v1842 = vsub.f32 %v1836, %v1839
        %v1843 = vmul.f32 %v1840, 0.56
        %v1844 = vmul.f32 %v1841, 0.56
        %v1845 = vmul.f32 %v1842, 0.56
        %s1846 = scalar_lea.vmem %s5, 24
        %v1847 = vld [vmem:[%s1846] sm:$0xff]
        %v1849 = vsel %vm428, %v1847, 0
        %1851 = vmatprep.subr.mxu0 0.0
        %1852 = vmatpush1.msra.mxu0 0.0
        %1853 = vmatprep.subr.mxu0 0.0
        %1854 = vmatpush1.msra.mxu0 0.0
        %1855 = vmatprep.subr.mxu0 0.0
        %1856 = vmatpush1.msra.mxu0 0.0
        %1857 = vmatprep.subr.mxu0 0.0
        %1858 = vmatpush1.msra.mxu0 0.0
        %1859 = vmatprep.subr.mxu0 0.0
        %1860 = vmatpush1.msra.mxu0 0.0
        %1861 = vmatprep.subr.mxu0 0.0
        %1862 = vmatpush1.msra.mxu0 0.0
        %1863 = vmatprep.subr.mxu0 0.0
        %1864 = vmatpush1.msra.mxu0 0.0
        %1865 = vmatprep.subr.mxu0 0.0
        %1866 = vmatpush1.msra.mxu0 0.0
        %1867 = vmatprep.subr.mxu0 0.0
        %1868 = vmatpush1.msra.mxu0 0.0
        %1869 = vmatprep.subr.mxu0 0.0
        %1870 = vmatpush1.msra.mxu0 0.0
        %1871 = vmatprep.subr.mxu0 0.0
        %1872 = vmatpush1.msra.mxu0 0.0
        %1873 = vmatprep.subr.mxu0 0.0
        %1874 = vmatpush1.msra.mxu0 0.0
        %1875 = vmatprep.subr.mxu0 0.0
        %1876 = vmatpush1.msra.mxu0 %v1843
        %1877 = vmatprep.subr.mxu0 0.0
        %1878 = vmatpush1.msra.mxu0 %v1831
        %1879 = vmatprep.subr.mxu0 0.0
        %1880 = vmatpush1.msra.mxu0 %v1819
        %1881 = vmatprep.subr.mxu0 0.0
        %1882 = vmatpush1.msra.mxu0 1.0
        %1883 = vmatprep.subr.mxu0 0.0
        %1884 = vmatpush2.msra.mxu0 0.0
        %1885 = vmatprep.subr.mxu0 0.0
        %1886 = vmatpush2.msra.mxu0 0.0
        %1887 = vmatprep.subr.mxu0 0.0
        %1888 = vmatpush2.msra.mxu0 0.0
        %1889 = vmatprep.subr.mxu0 0.0
        %1890 = vmatpush2.msra.mxu0 0.0
        %1891 = vmatprep.subr.mxu0 0.0
        %1892 = vmatpush2.msra.mxu0 0.0
        %1893 = vmatprep.subr.mxu0 0.0
        %1894 = vmatpush2.msra.mxu0 0.0
        %1895 = vmatprep.subr.mxu0 0.0
        %1896 = vmatpush2.msra.mxu0 0.0
        %1897 = vmatprep.subr.mxu0 0.0
        %1898 = vmatpush2.msra.mxu0 0.0
        %1899 = vmatprep.subr.mxu0 0.0
        %1900 = vmatpush2.msra.mxu0 0.0
        %1901 = vmatprep.subr.mxu0 0.0
        %1902 = vmatpush2.msra.mxu0 0.0
        %1903 = vmatprep.subr.mxu0 0.0
        %1904 = vmatpush2.msra.mxu0 0.0
        %1905 = vmatprep.subr.mxu0 0.0
        %1906 = vmatpush2.msra.mxu0 0.0
        %1907 = vmatprep.subr.mxu0 0.0
        %1908 = vmatpush2.msra.mxu0 0.0
        %1909 = vmatprep.subr.mxu0 0.0
        %1910 = vmatpush2.msra.mxu0 0.0
        %1911 = vmatprep.subr.mxu0 0.0
        %1912 = vmatpush2.msra.mxu0 0.0
        %1913 = vmatprep.subr.mxu0 0.0
        %1914 = vmatpush2.msra.mxu0 0.0
        %1915 = vmatprep.mubr.f32.mxu0 0.0
        %1916 = vmatmul.mubr.f32.gmra.mxu0 %v1849
        %v1917 = vpop.f32.mrf.mxu0
        %v1918 = vadd.f32 0.0, %v1917
        %v1919 = vpop.f32.mrf.mxu0
        %1920 = vdwg.mxu0
        %1921 = vmatprep.subr.mxu0 0.0
        %1922 = vmatpush1.msra.mxu0 0.0
        %1923 = vmatprep.subr.mxu0 0.0
        %1924 = vmatpush1.msra.mxu0 0.0
        %1925 = vmatprep.subr.mxu0 0.0
        %1926 = vmatpush1.msra.mxu0 0.0
        %1927 = vmatprep.subr.mxu0 0.0
        %1928 = vmatpush1.msra.mxu0 0.0
        %1929 = vmatprep.subr.mxu0 0.0
        %1930 = vmatpush1.msra.mxu0 0.0
        %1931 = vmatprep.subr.mxu0 0.0
        %1932 = vmatpush1.msra.mxu0 0.0
        %1933 = vmatprep.subr.mxu0 0.0
        %1934 = vmatpush1.msra.mxu0 0.0
        %1935 = vmatprep.subr.mxu0 0.0
        %1936 = vmatpush1.msra.mxu0 0.0
        %1937 = vmatprep.subr.mxu0 0.0
        %1938 = vmatpush1.msra.mxu0 0.0
        %1939 = vmatprep.subr.mxu0 0.0
        %1940 = vmatpush1.msra.mxu0 0.0
        %1941 = vmatprep.subr.mxu0 0.0
        %1942 = vmatpush1.msra.mxu0 0.0
        %1943 = vmatprep.subr.mxu0 0.0
        %1944 = vmatpush1.msra.mxu0 0.0
        %1945 = vmatprep.subr.mxu0 0.0
        %1946 = vmatpush1.msra.mxu0 %v1844
        %1947 = vmatprep.subr.mxu0 0.0
        %1948 = vmatpush1.msra.mxu0 %v1832
        %1949 = vmatprep.subr.mxu0 0.0
        %1950 = vmatpush1.msra.mxu0 %v1820
        %1951 = vmatprep.subr.mxu0 0.0
        %1952 = vmatpush1.msra.mxu0 1.0
        %1953 = vmatprep.subr.mxu0 0.0
        %1954 = vmatpush2.msra.mxu0 0.0
        %1955 = vmatprep.subr.mxu0 0.0
        %1956 = vmatpush2.msra.mxu0 0.0
        %1957 = vmatprep.subr.mxu0 0.0
        %1958 = vmatpush2.msra.mxu0 0.0
        %1959 = vmatprep.subr.mxu0 0.0
        %1960 = vmatpush2.msra.mxu0 0.0
        %1961 = vmatprep.subr.mxu0 0.0
        %1962 = vmatpush2.msra.mxu0 0.0
        %1963 = vmatprep.subr.mxu0 0.0
        %1964 = vmatpush2.msra.mxu0 0.0
        %1965 = vmatprep.subr.mxu0 0.0
        %1966 = vmatpush2.msra.mxu0 0.0
        %1967 = vmatprep.subr.mxu0 0.0
        %1968 = vmatpush2.msra.mxu0 0.0
        %1969 = vmatprep.subr.mxu0 0.0
        %1970 = vmatpush2.msra.mxu0 0.0
        %1971 = vmatprep.subr.mxu0 0.0
        %1972 = vmatpush2.msra.mxu0 0.0
        %1973 = vmatprep.subr.mxu0 0.0
        %1974 = vmatpush2.msra.mxu0 0.0
        %1975 = vmatprep.subr.mxu0 0.0
        %1976 = vmatpush2.msra.mxu0 0.0
        %1977 = vmatprep.subr.mxu0 0.0
        %1978 = vmatpush2.msra.mxu0 0.0
        %1979 = vmatprep.subr.mxu0 0.0
        %1980 = vmatpush2.msra.mxu0 0.0
        %1981 = vmatprep.subr.mxu0 0.0
        %1982 = vmatpush2.msra.mxu0 0.0
        %1983 = vmatprep.subr.mxu0 0.0
        %1984 = vmatpush2.msra.mxu0 0.0
        %1985 = vmatprep.mubr.f32.mxu0 0.0
        %1986 = vmatmul.mubr.f32.gmra.mxu0 %v1849
        %v1987 = vpop.f32.mrf.mxu0
        %v1988 = vadd.f32 0.0, %v1987
        %v1989 = vpop.f32.mrf.mxu0
        %1990 = vdwg.mxu0
        %1991 = vmatprep.subr.mxu0 0.0
        %1992 = vmatpush1.msra.mxu0 0.0
        %1993 = vmatprep.subr.mxu0 0.0
        %1994 = vmatpush1.msra.mxu0 0.0
        %1995 = vmatprep.subr.mxu0 0.0
        %1996 = vmatpush1.msra.mxu0 0.0
        %1997 = vmatprep.subr.mxu0 0.0
        %1998 = vmatpush1.msra.mxu0 0.0
        %1999 = vmatprep.subr.mxu0 0.0
        %2000 = vmatpush1.msra.mxu0 0.0
        %2001 = vmatprep.subr.mxu0 0.0
        %2002 = vmatpush1.msra.mxu0 0.0
        %2003 = vmatprep.subr.mxu0 0.0
        %2004 = vmatpush1.msra.mxu0 0.0
        %2005 = vmatprep.subr.mxu0 0.0
        %2006 = vmatpush1.msra.mxu0 0.0
        %2007 = vmatprep.subr.mxu0 0.0
        %2008 = vmatpush1.msra.mxu0 0.0
        %2009 = vmatprep.subr.mxu0 0.0
        %2010 = vmatpush1.msra.mxu0 0.0
        %2011 = vmatprep.subr.mxu0 0.0
        %2012 = vmatpush1.msra.mxu0 0.0
        %2013 = vmatprep.subr.mxu0 0.0
        %2014 = vmatpush1.msra.mxu0 0.0
        %2015 = vmatprep.subr.mxu0 0.0
        %2016 = vmatpush1.msra.mxu0 %v1845
        %2017 = vmatprep.subr.mxu0 0.0
        %2018 = vmatpush1.msra.mxu0 %v1833
        %2019 = vmatprep.subr.mxu0 0.0
        %2020 = vmatpush1.msra.mxu0 %v1821
        %2021 = vmatprep.subr.mxu0 0.0
        %2022 = vmatpush1.msra.mxu0 1.0
        %2023 = vmatprep.subr.mxu0 0.0
        %2024 = vmatpush2.msra.mxu0 0.0
        %2025 = vmatprep.subr.mxu0 0.0
        %2026 = vmatpush2.msra.mxu0 0.0
        %2027 = vmatprep.subr.mxu0 0.0
        %2028 = vmatpush2.msra.mxu0 0.0
        %2029 = vmatprep.subr.mxu0 0.0
        %2030 = vmatpush2.msra.mxu0 0.0
        %2031 = vmatprep.subr.mxu0 0.0
        %2032 = vmatpush2.msra.mxu0 0.0
        %2033 = vmatprep.subr.mxu0 0.0
        %2034 = vmatpush2.msra.mxu0 0.0
        %2035 = vmatprep.subr.mxu0 0.0
        %2036 = vmatpush2.msra.mxu0 0.0
        %2037 = vmatprep.subr.mxu0 0.0
        %2038 = vmatpush2.msra.mxu0 0.0
        %2039 = vmatprep.subr.mxu0 0.0
        %2040 = vmatpush2.msra.mxu0 0.0
        %2041 = vmatprep.subr.mxu0 0.0
        %2042 = vmatpush2.msra.mxu0 0.0
        %2043 = vmatprep.subr.mxu0 0.0
        %2044 = vmatpush2.msra.mxu0 0.0
        %2045 = vmatprep.subr.mxu0 0.0
        %2046 = vmatpush2.msra.mxu0 0.0
        %2047 = vmatprep.subr.mxu0 0.0
        %2048 = vmatpush2.msra.mxu0 0.0
        %2049 = vmatprep.subr.mxu0 0.0
        %2050 = vmatpush2.msra.mxu0 0.0
        %2051 = vmatprep.subr.mxu0 0.0
        %2052 = vmatpush2.msra.mxu0 0.0
        %2053 = vmatprep.subr.mxu0 0.0
        %2054 = vmatpush2.msra.mxu0 0.0
        %2055 = vmatprep.mubr.f32.mxu0 0.0
        %2056 = vmatmul.mubr.f32.gmra.mxu0 %v1849
        %v2057 = vpop.f32.mrf.mxu0
        %v2058 = vadd.f32 0.0, %v2057
        %v2059 = vpop.f32.mrf.mxu0
        %2060 = vdwg.mxu0
        %v2061 = vadd.f32 %v1635, %v1918
        %v2062 = vadd.f32 %v1636, %v1988
        %v2063 = vadd.f32 %v1637, %v2058
        %v2064 = vtanh.pop %v2061
        %v2065 = vtanh.pop %v2062
        %v2066 = vtanh.pop %v2063
        %v2067 = vmul.f32 %v2064, 0.2857143
        %v2068 = vmul.f32 %v2065, 0.2857143
        %v2069 = vmul.f32 %v2066, 0.2857143
        %v2070 = vsub.f32 1.0, %v2067
        %v2071 = vsub.f32 1.0, %v2068
        %v2072 = vsub.f32 1.0, %v2069
        %v2073 = vsub.f32 3.5, %v2064
        %v2074 = vsub.f32 3.5, %v2065
        %v2075 = vsub.f32 3.5, %v2066
        %v2076 = vmul.f32 %v2073, %v2070
        %v2077 = vmul.f32 %v2074, %v2071
        %v2078 = vmul.f32 %v2075, %v2072
        %v2079 = vsub.f32 %v2076, 1.1
        %v2080 = vsub.f32 %v2077, 1.1
        %v2081 = vsub.f32 %v2078, 1.1
        %v2082 = vmul.f32 %v2079, 0.41666666
        %v2083 = vmul.f32 %v2080, 0.41666666
        %v2084 = vmul.f32 %v2081, 0.41666666
        %v2085 = vmul.f32 %v2073, %v2082
        %v2086 = vmul.f32 %v2074, %v2083
        %v2087 = vmul.f32 %v2075, %v2084
        %v2088 = vmul.f32 %v2070, 1.7142857
        %v2089 = vmul.f32 %v2071, 1.7142857
        %v2090 = vmul.f32 %v2072, 1.7142857
        %v2091 = vsub.f32 %v2085, %v2088
        %v2092 = vsub.f32 %v2086, %v2089
        %v2093 = vsub.f32 %v2087, %v2090
        %v2094 = vmul.f32 %v2091, 0.56
        %v2095 = vmul.f32 %v2092, 0.56
        %v2096 = vmul.f32 %v2093, 0.56
        %2100 = vrot.lane.b32.xlu0 %v2070, 32
        %v2101 = vpop.permute.xlu0 %2100
        %2102 = vrot.lane.b32.xlu0 %v2071, 32
        %v2103 = vpop.permute.xlu0 %2102
        %2104 = vrot.lane.b32.xlu0 %v2072, 32
        %v2105 = vpop.permute.xlu0 %2104
        %2112 = vrot.lane.b32.xlu0 %v2082, 64
        %v2113 = vpop.permute.xlu0 %2112
        %2114 = vrot.lane.b32.xlu0 %v2083, 64
        %v2115 = vpop.permute.xlu0 %2114
        %2116 = vrot.lane.b32.xlu0 %v2084, 64
        %v2117 = vpop.permute.xlu0 %2116
        %2124 = vrot.lane.b32.xlu0 %v2094, 96
        %v2125 = vpop.permute.xlu0 %2124
        %2126 = vrot.lane.b32.xlu0 %v2095, 96
        %v2127 = vpop.permute.xlu0 %2126
        %2128 = vrot.lane.b32.xlu0 %v2096, 96
        %v2129 = vpop.permute.xlu0 %2128
        %v2133 = vsel %vm428, 1.0, %v2101
        %v2134 = vsel %vm428, 1.0, %v2103
        %v2135 = vsel %vm428, 1.0, %v2105
        %v2136 = vsel %vm432, %v2133, %v2113
        %v2137 = vsel %vm432, %v2134, %v2115
        %v2138 = vsel %vm432, %v2135, %v2117
        %v2139 = vsel %vm436, %v2136, %v2125
        %v2140 = vsel %vm436, %v2137, %v2127
        %v2141 = vsel %vm436, %v2138, %v2129
        %s2142 = scalar_lea.vmem %s4, 512
        %v2143 = vld [vmem:[%s2142] sm:$0xff]
        %v2144 = vld [vmem:[%s2142 + $0x8] sm:$0xff]
        %v2145 = vld [vmem:[%s2142 + $0x10] sm:$0xff]
        %v2146 = vld [vmem:[%s2142 + $0x18] sm:$0xff]
        %v2147 = vld [vmem:[%s2142 + $0x20] sm:$0xff]
        %v2148 = vld [vmem:[%s2142 + $0x28] sm:$0xff]
        %v2149 = vld [vmem:[%s2142 + $0x30] sm:$0xff]
        %v2150 = vld [vmem:[%s2142 + $0x38] sm:$0xff]
        %v2151 = vld [vmem:[%s2142 + $0x40] sm:$0xff]
        %v2152 = vld [vmem:[%s2142 + $0x48] sm:$0xff]
        %v2153 = vld [vmem:[%s2142 + $0x50] sm:$0xff]
        %v2154 = vld [vmem:[%s2142 + $0x58] sm:$0xff]
        %v2155 = vld [vmem:[%s2142 + $0x60] sm:$0xff]
        %v2156 = vld [vmem:[%s2142 + $0x68] sm:$0xff]
        %v2157 = vld [vmem:[%s2142 + $0x70] sm:$0xff]
        %v2158 = vld [vmem:[%s2142 + $0x78] sm:$0xff]
        %2159 = vmatprep.subr.mxu0 0.0
        %2160 = vmatpush1.msra.mxu0 %v2158
        %2161 = vmatprep.subr.mxu0 0.0
        %2162 = vmatpush1.msra.mxu0 %v2157
        %2163 = vmatprep.subr.mxu0 0.0
        %2164 = vmatpush1.msra.mxu0 %v2156
        %2165 = vmatprep.subr.mxu0 0.0
        %2166 = vmatpush1.msra.mxu0 %v2155
        %2167 = vmatprep.subr.mxu0 0.0
        %2168 = vmatpush1.msra.mxu0 %v2154
        %2169 = vmatprep.subr.mxu0 0.0
        %2170 = vmatpush1.msra.mxu0 %v2153
        %2171 = vmatprep.subr.mxu0 0.0
        %2172 = vmatpush1.msra.mxu0 %v2152
        %2173 = vmatprep.subr.mxu0 0.0
        %2174 = vmatpush1.msra.mxu0 %v2151
        %2175 = vmatprep.subr.mxu0 0.0
        %2176 = vmatpush1.msra.mxu0 %v2150
        %2177 = vmatprep.subr.mxu0 0.0
        %2178 = vmatpush1.msra.mxu0 %v2149
        %2179 = vmatprep.subr.mxu0 0.0
        %2180 = vmatpush1.msra.mxu0 %v2148
        %2181 = vmatprep.subr.mxu0 0.0
        %2182 = vmatpush1.msra.mxu0 %v2147
        %2183 = vmatprep.subr.mxu0 0.0
        %2184 = vmatpush1.msra.mxu0 %v2146
        %2185 = vmatprep.subr.mxu0 0.0
        %2186 = vmatpush1.msra.mxu0 %v2145
        %2187 = vmatprep.subr.mxu0 0.0
        %2188 = vmatpush1.msra.mxu0 %v2144
        %2189 = vmatprep.subr.mxu0 0.0
        %2190 = vmatpush1.msra.mxu0 %v2143
        %2191 = vmatprep.subr.mxu0 0.0
        %2192 = vmatpush2.msra.mxu0 0.0
        %2193 = vmatprep.subr.mxu0 0.0
        %2194 = vmatpush2.msra.mxu0 0.0
        %2195 = vmatprep.subr.mxu0 0.0
        %2196 = vmatpush2.msra.mxu0 0.0
        %2197 = vmatprep.subr.mxu0 0.0
        %2198 = vmatpush2.msra.mxu0 0.0
        %2199 = vmatprep.subr.mxu0 0.0
        %2200 = vmatpush2.msra.mxu0 0.0
        %2201 = vmatprep.subr.mxu0 0.0
        %2202 = vmatpush2.msra.mxu0 0.0
        %2203 = vmatprep.subr.mxu0 0.0
        %2204 = vmatpush2.msra.mxu0 0.0
        %2205 = vmatprep.subr.mxu0 0.0
        %2206 = vmatpush2.msra.mxu0 0.0
        %2207 = vmatprep.subr.mxu0 0.0
        %2208 = vmatpush2.msra.mxu0 0.0
        %2209 = vmatprep.subr.mxu0 0.0
        %2210 = vmatpush2.msra.mxu0 0.0
        %2211 = vmatprep.subr.mxu0 0.0
        %2212 = vmatpush2.msra.mxu0 0.0
        %2213 = vmatprep.subr.mxu0 0.0
        %2214 = vmatpush2.msra.mxu0 0.0
        %2215 = vmatprep.subr.mxu0 0.0
        %2216 = vmatpush2.msra.mxu0 0.0
        %2217 = vmatprep.subr.mxu0 0.0
        %2218 = vmatpush2.msra.mxu0 0.0
        %2219 = vmatprep.subr.mxu0 0.0
        %2220 = vmatpush2.msra.mxu0 0.0
        %2221 = vmatprep.subr.mxu0 0.0
        %2222 = vmatpush2.msra.mxu0 0.0
        %2223 = vmatprep.mubr.f32.mxu0 0.0
        %2224 = vmatmul.mubr.f32.gmra.mxu0 %v2139
        %v2225 = vpop.f32.mrf.mxu0
        %v2226 = vadd.f32 0.0, %v2225
        %v2227 = vpop.f32.mrf.mxu0
        %2228 = vmatprep.mubr.f32.mxu0 0.0
        %2229 = vmatmul.mubr.f32.gmra.mxu0 %v2140
        %v2230 = vpop.f32.mrf.mxu0
        %v2231 = vadd.f32 0.0, %v2230
        %v2232 = vpop.f32.mrf.mxu0
        %2233 = vmatprep.mubr.f32.mxu0 0.0
        %2234 = vmatmul.mubr.f32.gmra.mxu0 %v2141
        %v2235 = vpop.f32.mrf.mxu0
        %v2236 = vadd.f32 0.0, %v2235
        %v2237 = vpop.f32.mrf.mxu0
        %2238 = vdwg.mxu0
        %v2239 = vtanh.pop %v2226
        %v2240 = vtanh.pop %v2231
        %v2241 = vtanh.pop %v2236
        %v2242 = vmul.f32 %v2239, 0.2857143
        %v2243 = vmul.f32 %v2240, 0.2857143
        %v2244 = vmul.f32 %v2241, 0.2857143
        %v2245 = vsub.f32 1.0, %v2242
        %v2246 = vsub.f32 1.0, %v2243
        %v2247 = vsub.f32 1.0, %v2244
        %v2248 = vsub.f32 3.5, %v2239
        %v2249 = vsub.f32 3.5, %v2240
        %v2250 = vsub.f32 3.5, %v2241
        %v2251 = vmul.f32 %v2248, %v2245
        %v2252 = vmul.f32 %v2249, %v2246
        %v2253 = vmul.f32 %v2250, %v2247
        %v2254 = vsub.f32 %v2251, 1.1
        %v2255 = vsub.f32 %v2252, 1.1
        %v2256 = vsub.f32 %v2253, 1.1
        %v2257 = vmul.f32 %v2254, 0.41666666
        %v2258 = vmul.f32 %v2255, 0.41666666
        %v2259 = vmul.f32 %v2256, 0.41666666
        %v2260 = vmul.f32 %v2248, %v2257
        %v2261 = vmul.f32 %v2249, %v2258
        %v2262 = vmul.f32 %v2250, %v2259
        %v2263 = vmul.f32 %v2245, 1.7142857
        %v2264 = vmul.f32 %v2246, 1.7142857
        %v2265 = vmul.f32 %v2247, 1.7142857
        %v2266 = vsub.f32 %v2260, %v2263
        %v2267 = vsub.f32 %v2261, %v2264
        %v2268 = vsub.f32 %v2262, %v2265
        %v2269 = vmul.f32 %v2266, 0.56
        %v2270 = vmul.f32 %v2267, 0.56
        %v2271 = vmul.f32 %v2268, 0.56
        %s2272 = scalar_lea.vmem %s5, 32
        %v2273 = vld [vmem:[%s2272] sm:$0xff]
        %v2275 = vsel %vm428, %v2273, 0
        %2277 = vmatprep.subr.mxu0 0.0
        %2278 = vmatpush1.msra.mxu0 0.0
        %2279 = vmatprep.subr.mxu0 0.0
        %2280 = vmatpush1.msra.mxu0 0.0
        %2281 = vmatprep.subr.mxu0 0.0
        %2282 = vmatpush1.msra.mxu0 0.0
        %2283 = vmatprep.subr.mxu0 0.0
        %2284 = vmatpush1.msra.mxu0 0.0
        %2285 = vmatprep.subr.mxu0 0.0
        %2286 = vmatpush1.msra.mxu0 0.0
        %2287 = vmatprep.subr.mxu0 0.0
        %2288 = vmatpush1.msra.mxu0 0.0
        %2289 = vmatprep.subr.mxu0 0.0
        %2290 = vmatpush1.msra.mxu0 0.0
        %2291 = vmatprep.subr.mxu0 0.0
        %2292 = vmatpush1.msra.mxu0 0.0
        %2293 = vmatprep.subr.mxu0 0.0
        %2294 = vmatpush1.msra.mxu0 0.0
        %2295 = vmatprep.subr.mxu0 0.0
        %2296 = vmatpush1.msra.mxu0 0.0
        %2297 = vmatprep.subr.mxu0 0.0
        %2298 = vmatpush1.msra.mxu0 0.0
        %2299 = vmatprep.subr.mxu0 0.0
        %2300 = vmatpush1.msra.mxu0 0.0
        %2301 = vmatprep.subr.mxu0 0.0
        %2302 = vmatpush1.msra.mxu0 %v2269
        %2303 = vmatprep.subr.mxu0 0.0
        %2304 = vmatpush1.msra.mxu0 %v2257
        %2305 = vmatprep.subr.mxu0 0.0
        %2306 = vmatpush1.msra.mxu0 %v2245
        %2307 = vmatprep.subr.mxu0 0.0
        %2308 = vmatpush1.msra.mxu0 1.0
        %2309 = vmatprep.subr.mxu0 0.0
        %2310 = vmatpush2.msra.mxu0 0.0
        %2311 = vmatprep.subr.mxu0 0.0
        %2312 = vmatpush2.msra.mxu0 0.0
        %2313 = vmatprep.subr.mxu0 0.0
        %2314 = vmatpush2.msra.mxu0 0.0
        %2315 = vmatprep.subr.mxu0 0.0
        %2316 = vmatpush2.msra.mxu0 0.0
        %2317 = vmatprep.subr.mxu0 0.0
        %2318 = vmatpush2.msra.mxu0 0.0
        %2319 = vmatprep.subr.mxu0 0.0
        %2320 = vmatpush2.msra.mxu0 0.0
        %2321 = vmatprep.subr.mxu0 0.0
        %2322 = vmatpush2.msra.mxu0 0.0
        %2323 = vmatprep.subr.mxu0 0.0
        %2324 = vmatpush2.msra.mxu0 0.0
        %2325 = vmatprep.subr.mxu0 0.0
        %2326 = vmatpush2.msra.mxu0 0.0
        %2327 = vmatprep.subr.mxu0 0.0
        %2328 = vmatpush2.msra.mxu0 0.0
        %2329 = vmatprep.subr.mxu0 0.0
        %2330 = vmatpush2.msra.mxu0 0.0
        %2331 = vmatprep.subr.mxu0 0.0
        %2332 = vmatpush2.msra.mxu0 0.0
        %2333 = vmatprep.subr.mxu0 0.0
        %2334 = vmatpush2.msra.mxu0 0.0
        %2335 = vmatprep.subr.mxu0 0.0
        %2336 = vmatpush2.msra.mxu0 0.0
        %2337 = vmatprep.subr.mxu0 0.0
        %2338 = vmatpush2.msra.mxu0 0.0
        %2339 = vmatprep.subr.mxu0 0.0
        %2340 = vmatpush2.msra.mxu0 0.0
        %2341 = vmatprep.mubr.f32.mxu0 0.0
        %2342 = vmatmul.mubr.f32.gmra.mxu0 %v2275
        %v2343 = vpop.f32.mrf.mxu0
        %v2344 = vadd.f32 0.0, %v2343
        %v2345 = vpop.f32.mrf.mxu0
        %2346 = vdwg.mxu0
        %2347 = vmatprep.subr.mxu0 0.0
        %2348 = vmatpush1.msra.mxu0 0.0
        %2349 = vmatprep.subr.mxu0 0.0
        %2350 = vmatpush1.msra.mxu0 0.0
        %2351 = vmatprep.subr.mxu0 0.0
        %2352 = vmatpush1.msra.mxu0 0.0
        %2353 = vmatprep.subr.mxu0 0.0
        %2354 = vmatpush1.msra.mxu0 0.0
        %2355 = vmatprep.subr.mxu0 0.0
        %2356 = vmatpush1.msra.mxu0 0.0
        %2357 = vmatprep.subr.mxu0 0.0
        %2358 = vmatpush1.msra.mxu0 0.0
        %2359 = vmatprep.subr.mxu0 0.0
        %2360 = vmatpush1.msra.mxu0 0.0
        %2361 = vmatprep.subr.mxu0 0.0
        %2362 = vmatpush1.msra.mxu0 0.0
        %2363 = vmatprep.subr.mxu0 0.0
        %2364 = vmatpush1.msra.mxu0 0.0
        %2365 = vmatprep.subr.mxu0 0.0
        %2366 = vmatpush1.msra.mxu0 0.0
        %2367 = vmatprep.subr.mxu0 0.0
        %2368 = vmatpush1.msra.mxu0 0.0
        %2369 = vmatprep.subr.mxu0 0.0
        %2370 = vmatpush1.msra.mxu0 0.0
        %2371 = vmatprep.subr.mxu0 0.0
        %2372 = vmatpush1.msra.mxu0 %v2270
        %2373 = vmatprep.subr.mxu0 0.0
        %2374 = vmatpush1.msra.mxu0 %v2258
        %2375 = vmatprep.subr.mxu0 0.0
        %2376 = vmatpush1.msra.mxu0 %v2246
        %2377 = vmatprep.subr.mxu0 0.0
        %2378 = vmatpush1.msra.mxu0 1.0
        %2379 = vmatprep.subr.mxu0 0.0
        %2380 = vmatpush2.msra.mxu0 0.0
        %2381 = vmatprep.subr.mxu0 0.0
        %2382 = vmatpush2.msra.mxu0 0.0
        %2383 = vmatprep.subr.mxu0 0.0
        %2384 = vmatpush2.msra.mxu0 0.0
        %2385 = vmatprep.subr.mxu0 0.0
        %2386 = vmatpush2.msra.mxu0 0.0
        %2387 = vmatprep.subr.mxu0 0.0
        %2388 = vmatpush2.msra.mxu0 0.0
        %2389 = vmatprep.subr.mxu0 0.0
        %2390 = vmatpush2.msra.mxu0 0.0
        %2391 = vmatprep.subr.mxu0 0.0
        %2392 = vmatpush2.msra.mxu0 0.0
        %2393 = vmatprep.subr.mxu0 0.0
        %2394 = vmatpush2.msra.mxu0 0.0
        %2395 = vmatprep.subr.mxu0 0.0
        %2396 = vmatpush2.msra.mxu0 0.0
        %2397 = vmatprep.subr.mxu0 0.0
        %2398 = vmatpush2.msra.mxu0 0.0
        %2399 = vmatprep.subr.mxu0 0.0
        %2400 = vmatpush2.msra.mxu0 0.0
        %2401 = vmatprep.subr.mxu0 0.0
        %2402 = vmatpush2.msra.mxu0 0.0
        %2403 = vmatprep.subr.mxu0 0.0
        %2404 = vmatpush2.msra.mxu0 0.0
        %2405 = vmatprep.subr.mxu0 0.0
        %2406 = vmatpush2.msra.mxu0 0.0
        %2407 = vmatprep.subr.mxu0 0.0
        %2408 = vmatpush2.msra.mxu0 0.0
        %2409 = vmatprep.subr.mxu0 0.0
        %2410 = vmatpush2.msra.mxu0 0.0
        %2411 = vmatprep.mubr.f32.mxu0 0.0
        %2412 = vmatmul.mubr.f32.gmra.mxu0 %v2275
        %v2413 = vpop.f32.mrf.mxu0
        %v2414 = vadd.f32 0.0, %v2413
        %v2415 = vpop.f32.mrf.mxu0
        %2416 = vdwg.mxu0
        %2417 = vmatprep.subr.mxu0 0.0
        %2418 = vmatpush1.msra.mxu0 0.0
        %2419 = vmatprep.subr.mxu0 0.0
        %2420 = vmatpush1.msra.mxu0 0.0
        %2421 = vmatprep.subr.mxu0 0.0
        %2422 = vmatpush1.msra.mxu0 0.0
        %2423 = vmatprep.subr.mxu0 0.0
        %2424 = vmatpush1.msra.mxu0 0.0
        %2425 = vmatprep.subr.mxu0 0.0
        %2426 = vmatpush1.msra.mxu0 0.0
        %2427 = vmatprep.subr.mxu0 0.0
        %2428 = vmatpush1.msra.mxu0 0.0
        %2429 = vmatprep.subr.mxu0 0.0
        %2430 = vmatpush1.msra.mxu0 0.0
        %2431 = vmatprep.subr.mxu0 0.0
        %2432 = vmatpush1.msra.mxu0 0.0
        %2433 = vmatprep.subr.mxu0 0.0
        %2434 = vmatpush1.msra.mxu0 0.0
        %2435 = vmatprep.subr.mxu0 0.0
        %2436 = vmatpush1.msra.mxu0 0.0
        %2437 = vmatprep.subr.mxu0 0.0
        %2438 = vmatpush1.msra.mxu0 0.0
        %2439 = vmatprep.subr.mxu0 0.0
        %2440 = vmatpush1.msra.mxu0 0.0
        %2441 = vmatprep.subr.mxu0 0.0
        %2442 = vmatpush1.msra.mxu0 %v2271
        %2443 = vmatprep.subr.mxu0 0.0
        %2444 = vmatpush1.msra.mxu0 %v2259
        %2445 = vmatprep.subr.mxu0 0.0
        %2446 = vmatpush1.msra.mxu0 %v2247
        %2447 = vmatprep.subr.mxu0 0.0
        %2448 = vmatpush1.msra.mxu0 1.0
        %2449 = vmatprep.subr.mxu0 0.0
        %2450 = vmatpush2.msra.mxu0 0.0
        %2451 = vmatprep.subr.mxu0 0.0
        %2452 = vmatpush2.msra.mxu0 0.0
        %2453 = vmatprep.subr.mxu0 0.0
        %2454 = vmatpush2.msra.mxu0 0.0
        %2455 = vmatprep.subr.mxu0 0.0
        %2456 = vmatpush2.msra.mxu0 0.0
        %2457 = vmatprep.subr.mxu0 0.0
        %2458 = vmatpush2.msra.mxu0 0.0
        %2459 = vmatprep.subr.mxu0 0.0
        %2460 = vmatpush2.msra.mxu0 0.0
        %2461 = vmatprep.subr.mxu0 0.0
        %2462 = vmatpush2.msra.mxu0 0.0
        %2463 = vmatprep.subr.mxu0 0.0
        %2464 = vmatpush2.msra.mxu0 0.0
        %2465 = vmatprep.subr.mxu0 0.0
        %2466 = vmatpush2.msra.mxu0 0.0
        %2467 = vmatprep.subr.mxu0 0.0
        %2468 = vmatpush2.msra.mxu0 0.0
        %2469 = vmatprep.subr.mxu0 0.0
        %2470 = vmatpush2.msra.mxu0 0.0
        %2471 = vmatprep.subr.mxu0 0.0
        %2472 = vmatpush2.msra.mxu0 0.0
        %2473 = vmatprep.subr.mxu0 0.0
        %2474 = vmatpush2.msra.mxu0 0.0
        %2475 = vmatprep.subr.mxu0 0.0
        %2476 = vmatpush2.msra.mxu0 0.0
        %2477 = vmatprep.subr.mxu0 0.0
        %2478 = vmatpush2.msra.mxu0 0.0
        %2479 = vmatprep.subr.mxu0 0.0
        %2480 = vmatpush2.msra.mxu0 0.0
        %2481 = vmatprep.mubr.f32.mxu0 0.0
        %2482 = vmatmul.mubr.f32.gmra.mxu0 %v2275
        %v2483 = vpop.f32.mrf.mxu0
        %v2484 = vadd.f32 0.0, %v2483
        %v2485 = vpop.f32.mrf.mxu0
        %2486 = vdwg.mxu0
        %v2487 = vadd.f32 %v2061, %v2344
        %v2488 = vadd.f32 %v2062, %v2414
        %v2489 = vadd.f32 %v2063, %v2484
        %2490 = vst.msk [vmem:[%s245] sm:$0xff] %vm428, %v2487
        %2491 = vst.msk [vmem:[%s245 + $0x8] sm:$0xff] %vm428, %v2488
        %2492 = vst.msk [vmem:[%s245 + $0x10] sm:$0xff] %vm428, %v2489
        %s2493 = sand.u32 %s159, 1
        %s2494 = scalar_lea.sflag [#allocation3], %s2493
        %s2495 = sand.u32 %s159, 1
        %s2496 = smul.addr %s2495, 24
        %s2497 = scalar_lea.vmem [#allocation2], %s2496
        // Predicated region
        $region45: #{backbone_forward.1} parent=43 // pred_check
          %p2498 = pneg %p169
        $region46: #{backbone_forward.1} parent=43 // pred_check_branch
          %2500 = sbr.rel (%p2498) target = $region48
        $region47: #{backbone_forward.1} parent=43 // pred_region
          %s2501 = smul.u32 3, %s20
          %s2503 = ssub.s32 384, 384
          %2504 = vsyncadd %s2494, %s2503
          %s2505 = smul.addr %s2501, 128
          %s2506 = scalar_lea.hbm %s6, %s2505
          %s2507 = sshll.u32 %s2497, 4
          %s2508 = int_to_ptr.vmem [resolvable:$true] %s2507
          %2513 = dma.vmem_to_hbm [thread:$0]  %s2508, 384, %s2506, %s2494, 128, 128, 8
        $region48: #{backbone_forward.1} parent=43 // pred_fallthru
          _
      $region44: #{backbone_forward.1} parent=5 // pred_fallthru
        _
      %p2514 = scmp.le.s32.totalorder 2, %s15
      // Predicated region
      $region49: #{backbone_forward.1} parent=5 // pred_check
        %p2515 = pneg %p2514
      $region50: #{backbone_forward.1} parent=5 // pred_check_branch
        %2517 = sbr.rel (%p2515) target = $region52
      $region51: #{backbone_forward.1} parent=5 // pred_region
        %s2518 = ssub.s32 %s15, 2
        // Predicated region
        $region53: #{backbone_forward.1} parent=51 // pred_check
          %p2519 = pneg %p175
        $region54: #{backbone_forward.1} parent=51 // pred_check_branch
          %2521 = sbr.rel (%p2519) target = $region56
        $region55: #{backbone_forward.1} parent=51 // pred_region
          %s2522 = sand.u32 %s160, 1
          %s2523 = scalar_lea.sflag [#allocation3], %s2522
          %s2524 = sand.u32 %s160, 1
          %s2525 = smul.addr %s2524, 24
          %s2526 = scalar_lea.vmem [#allocation2], %s2525
          %2527 = dma.done %s2523, 384
        $region56: #{backbone_forward.1} parent=51 // pred_fallthru
          _
      $region52: #{backbone_forward.1} parent=5 // pred_fallthru
        _
    $region6: #{backbone_forward.1} parent=1 // loop_footer
      %s19 = sadd.s32 1, %s15
    $region7: #{backbone_forward.1} parent=1 // loop_footer_branch
      %14 = sbr.rel target = $region3
    $region8: #{backbone_forward.1} parent=1 // loop_exit
      _
    %2528 = vsyncpa [#allocation3], 1
    %s2529 = scalar_lea.sflag [#allocation3], 1
    %2530 = vsyncpa %s2529, 1

</llo_original>
